<compile_context>
chip_gen: v7x
topology: tpu7x:2x2x1
jax: 0.10.0
libtpu: 0.0.40
codegen_flags: <defaults>
</compile_context>

<pallas_src>
import functools

import jax
import jax.numpy as jnp
from jax import lax
from jax.experimental import pallas as pl
from jax.experimental.pallas import tpu as pltpu


# ---------------------------------------------------------------------------
# Fused kernel: conv (sub-pixel folded) + instance-norm stats + cond. affine
# + ReLU.  One grid step == one batch element.
# ---------------------------------------------------------------------------
def _upsample_block_kernel(xp_ref, w_ref, cs_ref, co_ref, out_ref,
                           mean_ref, m2_ref, *, row_tile):
    """Grid = (batch,).

    xp_ref  : (1, H+2, W+2, Cin)  edge-padded original-res input (matmul dtype)
    w_ref   : (9*Cin, 4*Cout)     folded sub-pixel conv weights (matmul dtype)
    cs_ref  : (1, 1, 4*Cout)      conditional scale, phase-tiled, f32
    co_ref  : (1, 1, 4*Cout)      conditional offset, phase-tiled, f32
    out_ref : (1, H, W, 4*Cout)   phase-major output, f32.  Written
                                  un-normalized in loop 1 (VMEM-resident conv
                                  scratch), normalized in place in loop 2.
    mean_ref, m2_ref : (1, 4*Cout) f32 running per-(phase,channel) mean / M2.
    """
    _, h, w, c4 = out_ref.shape
    cin = xp_ref.shape[3]
    cout = c4 // 4
    th = row_tile
    n_tiles = h // th
    cnt = float(th * w)                 # elements per (phase,channel) per tile
    aligned = (th % 8 == 0)

    mean_ref[...] = jnp.zeros_like(mean_ref)
    m2_ref[...] = jnp.zeros_like(m2_ref)

    # ---- loop 1: sub-pixel conv tiles + Chan-combined running statistics ----
    @pl.loop(0, n_tiles)
    def _(t):
        r0 = t * th
        if aligned:
            r0 = pl.multiple_of(r0, th)

        taps = []
        for kh in range(3):
            rows = xp_ref[0, pl.ds(r0 + kh, th), :, :]          # (th, W+2, Cin)
            for kw in range(3):
                taps.append(rows[:, kw:kw + w, :].reshape(th * w, cin))
        # TODO(synk): Cin=32 taps land at non-128-aligned lane offsets, so this
        # concat costs lane shuffles + a patch-sized VMEM copy; switch to
        # padded-Cin or per-kh accumulating matmuls if it ever becomes the
        # binding slot at large tiles (kernel is HBM-bound at current sizes).
        patch = jnp.concatenate(taps, axis=1)                   # (th*W, 9*Cin)
        acc = jnp.dot(patch, w_ref[...],
                      preferred_element_type=jnp.float32)       # (th*W, 4*Cout)
        out_ref[0, pl.ds(r0, th), :, :] = acc.reshape(th, w, c4)

        # Per-tile centered statistics, merged via Chan/Welford parallel
        # combine (avoids E[x^2]-E[x]^2 cancellation on large images).
        mean_t = jnp.sum(acc, axis=0, keepdims=True) * (1.0 / cnt)
        d = acc - mean_t
        m2_t = jnp.sum(d * d, axis=0, keepdims=True)
        n_a = (t * (th * w)).astype(jnp.float32)
        w_new = cnt / (n_a + cnt)
        delta = mean_t - mean_ref[...]
        mean_ref[...] = mean_ref[...] + delta * w_new
        m2_ref[...] = m2_ref[...] + m2_t + (delta * delta) * (n_a * w_new)

    # ---- combine the 4 phase columns into per-channel mean / inv_std --------
    def phase_sum(v):                       # (1, 4*Cout) -> (1, Cout)
        return (v[:, 0:cout] + v[:, cout:2 * cout]
                + v[:, 2 * cout:3 * cout] + v[:, 3 * cout:4 * cout])

    def phase_tile(v):                      # (1, Cout) -> (1, 4*Cout)
        return jnp.concatenate([v, v, v, v], axis=1)

    npix = float(h * w)                     # count per (phase, channel) column
    mean_col = mean_ref[...]
    m2_col = m2_ref[...]
    mean_ch = phase_sum(mean_col) * 0.25                        # (1, Cout)
    mean_full = phase_tile(mean_ch)                             # (1, 4*Cout)
    dmu = mean_col - mean_full
    var_ch = phase_sum(m2_col + npix * (dmu * dmu)) * (1.0 / (4.0 * npix))
    inv_std = lax.rsqrt(var_ch + 1e-5)                          # (1, Cout)

    # Fold rsqrt(var+eps), the mean shift and the conditional affine into a
    # single multiply-add (conv bias already dropped in the wrapper).
    eff_scale = cs_ref[0] * phase_tile(inv_std)                 # (1, 4*Cout)
    eff_offset = co_ref[0] - mean_full * eff_scale
    sc = eff_scale.reshape(1, 1, c4)
    of = eff_offset.reshape(1, 1, c4)

    # ---- loop 2: in-place normalize + conditional affine + ReLU -------------
    @pl.loop(0, n_tiles)
    def _(t):
        r0 = t * th
        if aligned:
            r0 = pl.multiple_of(r0, th)
        y = out_ref[0, pl.ds(r0, th), :, :]
        out_ref[0, pl.ds(r0, th), :, :] = jnp.maximum(y * sc + of, 0.0)


# ---------------------------------------------------------------------------
# Sub-pixel weight folding.
# ---------------------------------------------------------------------------
def _fold_subpixel_weights(conv_w_oihw):
    """Fold (nearest-2x upsample -> reflect-pad(1) -> 3x3 conv) into a single
    (9*Cin, 4*Cout) matrix acting on the EDGE-padded original-resolution image.

    Output phase (a, b) (a, b in {0, 1}) has a 2x2 receptive field in the
    original image; its folded weights are sums of the original 3x3 taps.  Each
    phase's 2x2 kernel is embedded at offset (a, b) inside a common 3x3
    footprint so all four phases share ONE im2col patch; the phase index is
    placed next to Cout (phase-major channel layout: column = phase*Cout + c).
    """
    cout, cin, _, _ = conv_w_oihw.shape
    w = jnp.transpose(conv_w_oihw, (2, 3, 1, 0))        # (kh, kw, Cin, Cout)
    # phase bit -> (original taps contributing to offset 0, to offset 1)
    tap_sets = {0: ((0,), (1, 2)), 1: ((0, 1), (2,))}
    w_eff = jnp.zeros((3, 3, cin, 4, cout), conv_w_oihw.dtype)
    for a in (0, 1):
        for b in (0, 1):
            for r in (0, 1):
                for c in (0, 1):
                    k = sum(w[kh, kw]
                            for kh in tap_sets[a][r]
                            for kw in tap_sets[b][c])   # (Cin, Cout)
                    w_eff = w_eff.at[a + r, b + c, :, 2 * a + b, :].set(k)
    return w_eff.reshape(9 * cin, 4 * cout)


def _pick_row_tile(h, w, cin, c4, op_bytes, budget_bytes=8 << 20):
    """Largest divisor of H (multiple of 8, or H itself) whose per-tile
    temporaries (im2col patch + f32 accumulator + output slab) fit the budget."""
    cands = [th for th in range(h, 0, -1)
             if h % th == 0 and (th % 8 == 0 or th == h)]
    for th in cands:
        per_tile = th * w * (9 * cin * op_bytes + 2 * c4 * 4)
        if per_tile <= budget_bytes:
            return th
    return cands[-1]


def _vmem_limit(est_bytes):
    """Generation-aware VMEM limit: <= 75% of physical capacity (v7x: 48 MiB)."""
    try:
        cap = int(pltpu.get_tpu_info().vmem_capacity_bytes * 3 // 4)
    except Exception:
        cap = 48 << 20          # conservative default (fits v7x's 64 MiB)
    return int(min(max(est_bytes, 16 << 20), cap))


# ---------------------------------------------------------------------------
# Wrapper.
# ---------------------------------------------------------------------------
@functools.partial(jax.jit, static_argnames=("row_tile", "matmul_dtype"))
def upsample_block_forward(x_nchw, style, conv_w_oihw, conv_b, scale_p,
                           offset_p, *, row_tile=None,
                           matmul_dtype=jnp.bfloat16):
    """UpsampleBlock forward pass.

    x_nchw   : (B, Cin, H, W)   float32
    style    : (B, S)           float32 (torch style (B, S, 1) squeezed)
    conv_w   : (Cout, Cin, 3, 3), conv_b: (Cout,)
    scale_p  : (S, Cout), offset_p: (S, Cout)   (torch (1, S, Cout) squeezed)
    returns  : (B, Cout, 2H, 2W) float32
    """
    # A per-channel constant added before InstanceNorm2d(affine=False) cancels
    # exactly in the mean subtraction -> the conv bias is a mathematical no-op.
    del conv_b

    B, cin, H, W = x_nchw.shape
    cout = conv_w_oihw.shape[0]
    c4 = 4 * cout
    op_b = jnp.dtype(matmul_dtype).itemsize

    th = row_tile if row_tile is not None else _pick_row_tile(H, W, cin, c4, op_b)
    if H % th != 0 or not (th % 8 == 0 or th == H):
        raise ValueError(
            f"row_tile={th} must divide H={H} and be a multiple of 8 (or == H)")

    # --- tiny original-resolution prep (no 4x-upsampled tensor, ever) -------
    x_nhwc = jnp.transpose(x_nchw, (0, 2, 3, 1))
    # Edge ("replicate") padding of the ORIGINAL image reproduces exactly the
    # reflect padding of the nearest-2x upsampled image under the folding.
    xp = jnp.pad(x_nhwc, ((0, 0), (1, 1), (1, 1), (0, 0)), mode="edge")
    xp = xp.astype(matmul_dtype)
    w_mat = _fold_subpixel_weights(conv_w_oihw).astype(matmul_dtype)

    # Style-conditional scale / offset, tiled to the phase-major channel axis
    # (column = phase*Cout + c), f32 for the norm math.
    cond_scale = jnp.tile(style @ scale_p, (1, 4)).reshape(B, 1, c4)
    cond_offset = jnp.tile(style @ offset_p, (1, 4)).reshape(B, 1, c4)
    cond_scale = cond_scale.astype(jnp.float32)
    cond_offset = cond_offset.astype(jnp.float32)

    est = (2 * (H + 2) * (W + 2) * cin * op_b        # xp (double-buffered)
           + 9 * cin * c4 * op_b                     # folded weights (1 buffer)
           + 2 * H * W * c4 * 4                      # output block (dbl-buffered)
           + 2 * th * W * (9 * cin * op_b + c4 * 4)  # patch + acc temporaries
           + 8 * c4 * 4                              # cond params + stats scratch
           + (4 << 20))                              # compiler headroom
    vmem_bytes = _vmem_limit(est)

    kernel = functools.partial(_upsample_block_kernel, row_tile=th)

    y_phase = pl.pallas_call(
        kernel,
        grid=(B,),
        in_specs=[
            # Whole edge-padded original-res image per batch element.
            # TODO(synk): halo row tiling (pl.ANY + manual DMA) plus a
            # stats-only + recompute fallback for images whose per-batch input
            # / output blocks exceed VMEM (matters on v7x's 64 MiB).
            pl.BlockSpec((1, H + 2, W + 2, cin), lambda b: (b, 0, 0, 0)),
            # Folded weights: block index is constant over the whole grid, so
            # double buffering buys nothing -> single buffer to free VMEM.
            pl.BlockSpec((9 * cin, c4), lambda b: (0, 0),
                         pipeline_mode=pl.Buffered(1)),
            pl.BlockSpec((1, 1, c4), lambda b: (b, 0, 0)),
            pl.BlockSpec((1, 1, c4), lambda b: (b, 0, 0)),
        ],
        out_specs=pl.BlockSpec((1, H, W, c4), lambda b: (b, 0, 0, 0)),
        out_shape=jax.ShapeDtypeStruct((B, H, W, c4), jnp.float32),
        scratch_shapes=[pltpu.VMEM((1, c4), jnp.float32),
                        pltpu.VMEM((1, c4), jnp.float32)],
        # TODO(synk): when B == 1 on v7x (2 TensorCores), split the image into
        # two row groups on a second "parallel" grid axis and Chan-combine the
        # two groups' statistics so both cores are used.
        compiler_params=pltpu.CompilerParams(
            dimension_semantics=("parallel",),
            vmem_limit_bytes=vmem_bytes),
    )(xp, w_mat, cond_scale, cond_offset)

    # Pixel shuffle fused into the single unavoidable NHWC->NCHW relayout.
    # TODO(synk): emit the final (B, Cout, 2H, 2W) layout directly from the
    # kernel when 2*W >= 128 to drop this pass as well.
    y = y_phase.reshape(B, H, W, 2, 2, cout)        # (b, i, j, a, b2, c)
    y = jnp.transpose(y, (0, 5, 1, 3, 2, 4))        # (b, c, i, a, j, b2)
    return y.reshape(B, cout, 2 * H, 2 * W)


# ---------------------------------------------------------------------------
# Pure-JAX reference mirroring the PyTorch forward.
# ---------------------------------------------------------------------------
def _reference(x_nchw, style, conv_w, conv_b, scale_p, offset_p):
    up = jnp.repeat(jnp.repeat(x_nchw, 2, axis=2), 2, axis=3)
    pad = jnp.pad(up, ((0, 0), (0, 0), (1, 1), (1, 1)), mode="reflect")
    y = lax.conv_general_dilated(
        pad, conv_w, window_strides=(1, 1), padding="VALID",
        dimension_numbers=("NCHW", "OIHW", "NCHW"),
        precision=lax.Precision.HIGHEST)
    y = y + conv_b[None, :, None, None]
    mean = jnp.mean(y, axis=(2, 3), keepdims=True)
    var = jnp.mean((y - mean) ** 2, axis=(2, 3), keepdims=True)
    yn = (y - mean) / jnp.sqrt(var + 1e-5)
    sc = jnp.einsum("bs,sc->bc", style, scale_p)
    of = jnp.einsum("bs,sc->bc", style, offset_p)
    out = yn * sc[:, :, None, None] + of[:, :, None, None]
    return jnp.maximum(out, 0.0)


if __name__ == "__main__":
    # Small config consistent with the module: num_style=4, in_fm=32,
    # out_fm=32 (phase-major channel axis 4*out_fm = 128 is lane-dense),
    # spatial 16 -> 32.
    B, Cin, Cout, S, H, W = 2, 32, 32, 4, 16, 16

    key = jax.random.PRNGKey(0)
    kx, ks, kw, kb, ksc, kof = jax.random.split(key, 6)

    x = jax.random.normal(kx, (B, Cin, H, W), dtype=jnp.float32)
    style = jax.random.normal(ks, (B, S), dtype=jnp.float32)
    conv_w = 0.1 * jax.random.normal(kw, (Cout, Cin, 3, 3), dtype=jnp.float32)
    conv_b = 0.1 * jax.random.normal(kb, (Cout,), dtype=jnp.float32)
    scale_p = 1.0 + 0.01 * jax.random.normal(ksc, (S, Cout), dtype=jnp.float32)
    offset_p = 0.01 * jax.random.normal(kof, (S, Cout), dtype=jnp.float32)

    ref = _reference(x, style, conv_w, conv_b, scale_p, offset_p)

    # f32 MXU operands, explicit 2 row tiles (exercises the Chan-combined
    # cross-tile instance-norm statistics).
    out = upsample_block_forward(x, style, conv_w, conv_b, scale_p, offset_p,
                                 row_tile=8, matmul_dtype=jnp.float32)
    out = jax.block_until_ready(out)
    assert out.shape == (B, Cout, 2 * H, 2 * W)
    assert jnp.allclose(out, ref, atol=5e-3, rtol=5e-3), \
        float(jnp.max(jnp.abs(out - ref)))

    # Default path: bf16 MXU operands (f32 accumulation), auto row tile.
    out_bf16 = upsample_block_forward(x, style, conv_w, conv_b, scale_p,
                                      offset_p)
    out_bf16 = jax.block_until_ready(out_bf16)
    assert jnp.allclose(out_bf16, ref, atol=5e-2, rtol=5e-2), \
        float(jnp.max(jnp.abs(out_bf16 - ref)))

    print("KERNEL_OK")
</pallas_src>

<mosaic_0001>
module attributes {stable_mosaic.version = 11 : i64} {
  func.func @_upsample_block_kernel(%arg0: i32, %arg1: memref<1x18x18x32xf32, #tpu.memory_space<vmem>>, %arg2: memref<288x128xf32, #tpu.memory_space<vmem>>, %arg3: memref<1x1x128xf32, #tpu.memory_space<vmem>>, %arg4: memref<1x1x128xf32, #tpu.memory_space<vmem>>, %arg5: memref<1x16x16x128xf32, #tpu.memory_space<vmem>>, %arg6: memref<1x128xf32, #tpu.memory_space<vmem>>, %arg7: memref<1x128xf32, #tpu.memory_space<vmem>>) attributes {dimension_semantics = [#tpu.dimension_semantics<parallel>], iteration_bounds = array<i64: 2>, scalar_prefetch = 0 : i64, scratch_operands = 2 : i64, tpu.core_type = #tpu.core_type<tc>, window_params = [{transform_indices = @transform_0, window_bounds = array<i64: 1, 18, 18, 32>}, {pipeline_mode = #tpu.pipeline_mode<synchronous>, transform_indices = @transform_1, window_bounds = array<i64: 288, 128>}, {transform_indices = @transform_2, window_bounds = array<i64: 1, 1, 128>}, {transform_indices = @transform_3, window_bounds = array<i64: 1, 1, 128>}, {transform_indices = @transform_4, window_bounds = array<i64: 1, 16, 16, 128>}]} {
    %cst = arith.constant 0.000000e+00 : f32
    %0 = vector.broadcast %cst : f32 to vector<1x128xf32>
    %c0 = arith.constant 0 : index
    %c0_0 = arith.constant 0 : index
    %1 = vector.load %arg6[%c0, %c0_0] : memref<1x128xf32, #tpu.memory_space<vmem>>, vector<1x128xf32>
    tpu.vector_store %arg6[%c0, %c0_0], %0 {strides = array<i32>} : memref<1x128xf32, #tpu.memory_space<vmem>>, vector<1x128xf32>,
    %cst_1 = arith.constant 0.000000e+00 : f32
    %2 = vector.broadcast %cst_1 : f32 to vector<1x128xf32>
    %c0_2 = arith.constant 0 : index
    %c0_3 = arith.constant 0 : index
    %3 = vector.load %arg7[%c0_2, %c0_3] : memref<1x128xf32, #tpu.memory_space<vmem>>, vector<1x128xf32>
    tpu.vector_store %arg7[%c0_2, %c0_3], %2 {strides = array<i32>} : memref<1x128xf32, #tpu.memory_space<vmem>>, vector<1x128xf32>,
    %c0_i32 = arith.constant 0 : i32
    %c2_i32 = arith.constant 2 : i32
    %4 = arith.addi %c0_i32, %c2_i32 : i32
    %c1_i32 = arith.constant 1 : i32
    scf.for %arg8 = %c0_i32 to %4 step %c1_i32  : i32 {
      %c1_i32_23 = arith.constant 1 : i32
      %45 = arith.muli %arg8, %c1_i32_23 : i32
      %c0_i32_24 = arith.constant 0 : i32
      %46 = arith.addi %c0_i32_24, %45 : i32
      %c8_i32 = arith.constant 8 : i32
      %47 = arith.muli %46, %c8_i32 : i32
      %48 = tpu.assume_multiple %47, 8 : i32
      %c0_i32_25 = arith.constant 0 : i32
      %49 = arith.addi %48, %c0_i32_25 : i32
      %c0_26 = arith.constant 0 : index
      %50 = arith.index_cast %49 : i32 to index
      %c0_27 = arith.constant 0 : index
      %c0_28 = arith.constant 0 : index
      %51 = vector.load %arg1[%c0_26, %50, %c0_27, %c0_28] : memref<1x18x18x32xf32, #tpu.memory_space<vmem>>, vector<1x8x18x32xf32>
      %52 = vector.shape_cast %51 : vector<1x8x18x32xf32> to vector<8x18x32xf32>
      %53 = vector.extract_strided_slice %52 {offsets = [0, 0, 0], sizes = [8, 16, 32], strides = [1, 1, 1]} : vector<8x18x32xf32> to vector<8x16x32xf32>
      %54 = vector.shape_cast %53 : vector<8x16x32xf32> to vector<128x32xf32>
      %55 = vector.extract_strided_slice %52 {offsets = [0, 1, 0], sizes = [8, 16, 32], strides = [1, 1, 1]} : vector<8x18x32xf32> to vector<8x16x32xf32>
      %56 = vector.shape_cast %55 : vector<8x16x32xf32> to vector<128x32xf32>
      %57 = vector.extract_strided_slice %52 {offsets = [0, 2, 0], sizes = [8, 16, 32], strides = [1, 1, 1]} : vector<8x18x32xf32> to vector<8x16x32xf32>
      %58 = vector.shape_cast %57 : vector<8x16x32xf32> to vector<128x32xf32>
      %c1_i32_29 = arith.constant 1 : i32
      %59 = arith.addi %48, %c1_i32_29 : i32
      %c0_30 = arith.constant 0 : index
      %60 = arith.index_cast %59 : i32 to index
      %c0_31 = arith.constant 0 : index
      %c0_32 = arith.constant 0 : index
      %61 = vector.load %arg1[%c0_30, %60, %c0_31, %c0_32] : memref<1x18x18x32xf32, #tpu.memory_space<vmem>>, vector<1x8x18x32xf32>
      %62 = vector.shape_cast %61 : vector<1x8x18x32xf32> to vector<8x18x32xf32>
      %63 = vector.extract_strided_slice %62 {offsets = [0, 0, 0], sizes = [8, 16, 32], strides = [1, 1, 1]} : vector<8x18x32xf32> to vector<8x16x32xf32>
      %64 = vector.shape_cast %63 : vector<8x16x32xf32> to vector<128x32xf32>
      %65 = vector.extract_strided_slice %62 {offsets = [0, 1, 0], sizes = [8, 16, 32], strides = [1, 1, 1]} : vector<8x18x32xf32> to vector<8x16x32xf32>
      %66 = vector.shape_cast %65 : vector<8x16x32xf32> to vector<128x32xf32>
      %67 = vector.extract_strided_slice %62 {offsets = [0, 2, 0], sizes = [8, 16, 32], strides = [1, 1, 1]} : vector<8x18x32xf32> to vector<8x16x32xf32>
      %68 = vector.shape_cast %67 : vector<8x16x32xf32> to vector<128x32xf32>
      %c2_i32_33 = arith.constant 2 : i32
      %69 = arith.addi %48, %c2_i32_33 : i32
      %c0_34 = arith.constant 0 : index
      %70 = arith.index_cast %69 : i32 to index
      %c0_35 = arith.constant 0 : index
      %c0_36 = arith.constant 0 : index
      %71 = vector.load %arg1[%c0_34, %70, %c0_35, %c0_36] : memref<1x18x18x32xf32, #tpu.memory_space<vmem>>, vector<1x8x18x32xf32>
      %72 = vector.shape_cast %71 : vector<1x8x18x32xf32> to vector<8x18x32xf32>
      %73 = vector.extract_strided_slice %72 {offsets = [0, 0, 0], sizes = [8, 16, 32], strides = [1, 1, 1]} : vector<8x18x32xf32> to vector<8x16x32xf32>
      %74 = vector.shape_cast %73 : vector<8x16x32xf32> to vector<128x32xf32>
      %75 = vector.extract_strided_slice %72 {offsets = [0, 1, 0], sizes = [8, 16, 32], strides = [1, 1, 1]} : vector<8x18x32xf32> to vector<8x16x32xf32>
      %76 = vector.shape_cast %75 : vector<8x16x32xf32> to vector<128x32xf32>
      %77 = vector.extract_strided_slice %72 {offsets = [0, 2, 0], sizes = [8, 16, 32], strides = [1, 1, 1]} : vector<8x18x32xf32> to vector<8x16x32xf32>
      %78 = vector.shape_cast %77 : vector<8x16x32xf32> to vector<128x32xf32>
      %79 = tpu.concatenate %54, %56, %58, %64, %66, %68, %74, %76, %78 in 1 : vector<128x32xf32>, vector<128x32xf32>, vector<128x32xf32>, vector<128x32xf32>, vector<128x32xf32>, vector<128x32xf32>, vector<128x32xf32>, vector<128x32xf32>, vector<128x32xf32> -> vector<128x288xf32>
      %c0_37 = arith.constant 0 : index
      %c0_38 = arith.constant 0 : index
      %80 = vector.load %arg2[%c0_37, %c0_38] : memref<288x128xf32, #tpu.memory_space<vmem>>, vector<288x128xf32>
      %cst_39 = arith.constant dense<0.000000e+00> : vector<128x128xf32>
      %81 = tpu.matmul %79, %80, %cst_39 {dimension_numbers = #tpu.dot_dimension_numbers<[1], [0], [0], [1], [0, 0, 1, 1], [], []>} : vector<128x288xf32>, vector<288x128xf32>, vector<128x128xf32> -> vector<128x128xf32>
      %82 = vector.shape_cast %81 : vector<128x128xf32> to vector<8x16x128xf32>
      %c0_40 = arith.constant 0 : index
      %83 = arith.index_cast %48 : i32 to index
      %c0_41 = arith.constant 0 : index
      %c0_42 = arith.constant 0 : index
      %84 = vector.load %arg5[%c0_40, %83, %c0_41, %c0_42] : memref<1x16x16x128xf32, #tpu.memory_space<vmem>>, vector<1x8x16x128xf32>
      %85 = vector.shape_cast %84 : vector<1x8x16x128xf32> to vector<8x16x128xf32>
      %86 = vector.shape_cast %82 : vector<8x16x128xf32> to vector<1x8x16x128xf32>
      tpu.vector_store %arg5[%c0_40, %83, %c0_41, %c0_42], %86 {strides = array<i32>} : memref<1x16x16x128xf32, #tpu.memory_space<vmem>>, vector<1x8x16x128xf32>,
      %cst_43 = arith.constant dense<0.000000e+00> : vector<128xf32>
      %87 = vector.multi_reduction <add>, %81, %cst_43 [0] : vector<128x128xf32> to vector<128xf32>
      %88 = vector.shape_cast %87 : vector<128xf32> to vector<1x128xf32>
      %cst_44 = arith.constant 7.812500e-03 : f32
      %89 = vector.broadcast %cst_44 : f32 to vector<1x128xf32>
      %90 = arith.mulf %88, %89 : vector<1x128xf32>
      %91 = vector.broadcast %90 : vector<1x128xf32> to vector<128x128xf32>
      %92 = arith.subf %81, %91 : vector<128x128xf32>
      %93 = arith.mulf %92, %92 : vector<128x128xf32>
      %cst_45 = arith.constant dense<0.000000e+00> : vector<128xf32>
      %94 = vector.multi_reduction <add>, %93, %cst_45 [0] : vector<128x128xf32> to vector<128xf32>
      %95 = vector.shape_cast %94 : vector<128xf32> to vector<1x128xf32>
      %c128_i32 = arith.constant 128 : i32
      %96 = arith.muli %46, %c128_i32 : i32
      %97 = arith.sitofp %96 : i32 to f32
      %cst_46 = arith.constant 1.280000e+02 : f32
      %98 = arith.addf %97, %cst_46 : f32
      %cst_47 = arith.constant 1.280000e+02 : f32
      %99 = arith.divf %cst_47, %98 : f32
      %c0_48 = arith.constant 0 : index
      %c0_49 = arith.constant 0 : index
      %100 = vector.load %arg6[%c0_48, %c0_49] : memref<1x128xf32, #tpu.memory_space<vmem>>, vector<1x128xf32>
      %101 = arith.subf %90, %100 : vector<1x128xf32>
      %c0_50 = arith.constant 0 : index
      %c0_51 = arith.constant 0 : index
      %102 = vector.load %arg6[%c0_50, %c0_51] : memref<1x128xf32, #tpu.memory_space<vmem>>, vector<1x128xf32>
      %103 = vector.broadcast %99 : f32 to vector<1x128xf32>
      %104 = arith.mulf %101, %103 : vector<1x128xf32>
      %105 = arith.addf %102, %104 : vector<1x128xf32>
      %c0_52 = arith.constant 0 : index
      %c0_53 = arith.constant 0 : index
      %106 = vector.load %arg6[%c0_52, %c0_53] : memref<1x128xf32, #tpu.memory_space<vmem>>, vector<1x128xf32>
      tpu.vector_store %arg6[%c0_52, %c0_53], %105 {strides = array<i32>} : memref<1x128xf32, #tpu.memory_space<vmem>>, vector<1x128xf32>,
      %c0_54 = arith.constant 0 : index
      %c0_55 = arith.constant 0 : index
      %107 = vector.load %arg7[%c0_54, %c0_55] : memref<1x128xf32, #tpu.memory_space<vmem>>, vector<1x128xf32>
      %108 = arith.addf %107, %95 : vector<1x128xf32>
      %109 = arith.mulf %101, %101 : vector<1x128xf32>
      %110 = arith.mulf %97, %99 : f32
      %111 = vector.broadcast %110 : f32 to vector<1x128xf32>
      %112 = arith.mulf %109, %111 : vector<1x128xf32>
      %113 = arith.addf %108, %112 : vector<1x128xf32>
      %c0_56 = arith.constant 0 : index
      %c0_57 = arith.constant 0 : index
      %114 = vector.load %arg7[%c0_56, %c0_57] : memref<1x128xf32, #tpu.memory_space<vmem>>, vector<1x128xf32>
      tpu.vector_store %arg7[%c0_56, %c0_57], %113 {strides = array<i32>} : memref<1x128xf32, #tpu.memory_space<vmem>>, vector<1x128xf32>,
    }
    %c2_i32_4 = arith.constant 2 : i32
    %c0_5 = arith.constant 0 : index
    %c0_6 = arith.constant 0 : index
    %5 = vector.load %arg6[%c0_5, %c0_6] : memref<1x128xf32, #tpu.memory_space<vmem>>, vector<1x128xf32>
    %c0_7 = arith.constant 0 : index
    %c0_8 = arith.constant 0 : index
    %6 = vector.load %arg7[%c0_7, %c0_8] : memref<1x128xf32, #tpu.memory_space<vmem>>, vector<1x128xf32>
    %7 = vector.extract_strided_slice %5 {offsets = [0, 0], sizes = [1, 32], strides = [1, 1]} : vector<1x128xf32> to vector<1x32xf32>
    %8 = vector.extract_strided_slice %5 {offsets = [0, 32], sizes = [1, 32], strides = [1, 1]} : vector<1x128xf32> to vector<1x32xf32>
    %9 = arith.addf %7, %8 : vector<1x32xf32>
    %10 = vector.extract_strided_slice %5 {offsets = [0, 64], sizes = [1, 32], strides = [1, 1]} : vector<1x128xf32> to vector<1x32xf32>
    %11 = arith.addf %9, %10 : vector<1x32xf32>
    %12 = vector.extract_strided_slice %5 {offsets = [0, 96], sizes = [1, 32], strides = [1, 1]} : vector<1x128xf32> to vector<1x32xf32>
    %13 = arith.addf %11, %12 : vector<1x32xf32>
    %cst_9 = arith.constant 2.500000e-01 : f32
    %14 = vector.broadcast %cst_9 : f32 to vector<1x32xf32>
    %15 = arith.mulf %13, %14 : vector<1x32xf32>
    %16 = tpu.concatenate %15, %15, %15, %15 in 1 : vector<1x32xf32>, vector<1x32xf32>, vector<1x32xf32>, vector<1x32xf32> -> vector<1x128xf32>
    %17 = arith.subf %5, %16 : vector<1x128xf32>
    %18 = arith.mulf %17, %17 : vector<1x128xf32>
    %cst_10 = arith.constant 2.560000e+02 : f32
    %19 = vector.broadcast %cst_10 : f32 to vector<1x128xf32>
    %20 = arith.mulf %19, %18 : vector<1x128xf32>
    %21 = arith.addf %6, %20 : vector<1x128xf32>
    %22 = vector.extract_strided_slice %21 {offsets = [0, 0], sizes = [1, 32], strides = [1, 1]} : vector<1x128xf32> to vector<1x32xf32>
    %23 = vector.extract_strided_slice %21 {offsets = [0, 32], sizes = [1, 32], strides = [1, 1]} : vector<1x128xf32> to vector<1x32xf32>
    %24 = arith.addf %22, %23 : vector<1x32xf32>
    %25 = vector.extract_strided_slice %21 {offsets = [0, 64], sizes = [1, 32], strides = [1, 1]} : vector<1x128xf32> to vector<1x32xf32>
    %26 = arith.addf %24, %25 : vector<1x32xf32>
    %27 = vector.extract_strided_slice %21 {offsets = [0, 96], sizes = [1, 32], strides = [1, 1]} : vector<1x128xf32> to vector<1x32xf32>
    %28 = arith.addf %26, %27 : vector<1x32xf32>
    %cst_11 = arith.constant 9.765625E-4 : f32
    %29 = vector.broadcast %cst_11 : f32 to vector<1x32xf32>
    %30 = arith.mulf %28, %29 : vector<1x32xf32>
    %cst_12 = arith.constant 9.99999974E-6 : f32
    %31 = vector.broadcast %cst_12 : f32 to vector<1x32xf32>
    %32 = arith.addf %30, %31 : vector<1x32xf32>
    %33 = math.rsqrt %32 : vector<1x32xf32>
    %c0_13 = arith.constant 0 : index
    %c0_14 = arith.constant 0 : index
    %c0_15 = arith.constant 0 : index
    %34 = vector.load %arg3[%c0_13, %c0_14, %c0_15] : memref<1x1x128xf32, #tpu.memory_space<vmem>>, vector<1x1x128xf32>
    %35 = vector.shape_cast %34 : vector<1x1x128xf32> to vector<1x128xf32>
    %36 = tpu.concatenate %33, %33, %33, %33 in 1 : vector<1x32xf32>, vector<1x32xf32>, vector<1x32xf32>, vector<1x32xf32> -> vector<1x128xf32>
    %37 = arith.mulf %35, %36 : vector<1x128xf32>
    %c0_16 = arith.constant 0 : index
    %c0_17 = arith.constant 0 : index
    %c0_18 = arith.constant 0 : index
    %38 = vector.load %arg4[%c0_16, %c0_17, %c0_18] : memref<1x1x128xf32, #tpu.memory_space<vmem>>, vector<1x1x128xf32>
    %39 = vector.shape_cast %38 : vector<1x1x128xf32> to vector<1x128xf32>
    %40 = arith.mulf %16, %37 : vector<1x128xf32>
    %41 = arith.subf %39, %40 : vector<1x128xf32>
    %42 = vector.shape_cast %37 : vector<1x128xf32> to vector<1x1x128xf32>
    %43 = vector.shape_cast %41 : vector<1x128xf32> to vector<1x1x128xf32>
    %c0_i32_19 = arith.constant 0 : i32
    %c2_i32_20 = arith.constant 2 : i32
    %44 = arith.addi %c0_i32_19, %c2_i32_20 : i32
    %c1_i32_21 = arith.constant 1 : i32
    scf.for %arg8 = %c0_i32_19 to %44 step %c1_i32_21  : i32 {
      %c1_i32_23 = arith.constant 1 : i32
      %45 = arith.muli %arg8, %c1_i32_23 : i32
      %c0_i32_24 = arith.constant 0 : i32
      %46 = arith.addi %c0_i32_24, %45 : i32
      %c8_i32 = arith.constant 8 : i32
      %47 = arith.muli %46, %c8_i32 : i32
      %48 = tpu.assume_multiple %47, 8 : i32
      %c0_25 = arith.constant 0 : index
      %49 = arith.index_cast %48 : i32 to index
      %c0_26 = arith.constant 0 : index
      %c0_27 = arith.constant 0 : index
      %50 = vector.load %arg5[%c0_25, %49, %c0_26, %c0_27] : memref<1x16x16x128xf32, #tpu.memory_space<vmem>>, vector<1x8x16x128xf32>
      %51 = vector.shape_cast %50 : vector<1x8x16x128xf32> to vector<8x16x128xf32>
      %52 = vector.broadcast %42 : vector<1x1x128xf32> to vector<8x16x128xf32>
      %53 = arith.mulf %51, %52 : vector<8x16x128xf32>
      %54 = vector.broadcast %43 : vector<1x1x128xf32> to vector<8x16x128xf32>
      %55 = arith.addf %53, %54 : vector<8x16x128xf32>
      %cst_28 = arith.constant 0.000000e+00 : f32
      %56 = vector.broadcast %cst_28 : f32 to vector<8x16x128xf32>
      %57 = arith.maximumf %55, %56 : vector<8x16x128xf32>
      %c0_29 = arith.constant 0 : index
      %58 = arith.index_cast %48 : i32 to index
      %c0_30 = arith.constant 0 : index
      %c0_31 = arith.constant 0 : index
      %59 = vector.load %arg5[%c0_29, %58, %c0_30, %c0_31] : memref<1x16x16x128xf32, #tpu.memory_space<vmem>>, vector<1x8x16x128xf32>
      %60 = vector.shape_cast %59 : vector<1x8x16x128xf32> to vector<8x16x128xf32>
      %61 = vector.shape_cast %57 : vector<8x16x128xf32> to vector<1x8x16x128xf32>
      tpu.vector_store %arg5[%c0_29, %58, %c0_30, %c0_31], %61 {strides = array<i32>} : memref<1x16x16x128xf32, #tpu.memory_space<vmem>>, vector<1x8x16x128xf32>,
    }
    %c2_i32_22 = arith.constant 2 : i32
    return
  }
  func.func @transform_0(%arg0: i32) -> (i32, i32, i32, i32) {
    %c0_i32 = arith.constant 0 : i32
    %c0_i32_0 = arith.constant 0 : i32
    %c0_i32_1 = arith.constant 0 : i32
    %c0_i32_2 = arith.constant 0 : i32
    return %arg0, %c0_i32, %c0_i32_0, %c0_i32_1 : i32, i32, i32, i32
  }
  func.func @transform_1(%arg0: i32) -> (i32, i32) {
    %c0_i32 = arith.constant 0 : i32
    %c0_i32_0 = arith.constant 0 : i32
    %c0_i32_1 = arith.constant 0 : i32
    return %c0_i32, %c0_i32_0 : i32, i32
  }
  func.func @transform_2(%arg0: i32) -> (i32, i32, i32) {
    %c0_i32 = arith.constant 0 : i32
    %c0_i32_0 = arith.constant 0 : i32
    %c0_i32_1 = arith.constant 0 : i32
    return %arg0, %c0_i32, %c0_i32_0 : i32, i32, i32
  }
  func.func @transform_3(%arg0: i32) -> (i32, i32, i32) {
    %c0_i32 = arith.constant 0 : i32
    %c0_i32_0 = arith.constant 0 : i32
    %c0_i32_1 = arith.constant 0 : i32
    return %arg0, %c0_i32, %c0_i32_0 : i32, i32, i32
  }
  func.func @transform_4(%arg0: i32) -> (i32, i32, i32, i32) {
    %c0_i32 = arith.constant 0 : i32
    %c0_i32_0 = arith.constant 0 : i32
    %c0_i32_1 = arith.constant 0 : i32
    %c0_i32_2 = arith.constant 0 : i32
    return %arg0, %c0_i32, %c0_i32_0, %c0_i32_1 : i32, i32, i32, i32
  }
}

</mosaic_0001>

<llo_original>
// kernel: upsample_block_forward.1
$region0: #{upsample_block_forward.1}
  #allocation0 [shape = 'u32[]', space=smem, size = 0x4, offset = 0x4, fixed_abs, tag = 'smem constant byte address 0x4 - core index']
  #allocation1 [shape = 'u32[144,128]{1,0:T(1,128)}', space=vmem, size = 0x12000, scoped, tag = 'internal scratch']
  #allocation2 [shape = 'f32[1,128]{1,0:T(1,128)}', space=vmem, size = 0x200, scoped, tag = 'scratch operand']
  #allocation3 [shape = 'f32[1,128]{1,0:T(1,128)}', space=vmem, size = 0x200, scoped, tag = 'scratch operand']
  %s0 = inlined_call_operand.vmem [shape: f32[2,18,18,32], index: 0, kind: input, shape index: {}]
  %s1 = inlined_call_operand.vmem [shape: f32[288,128], index: 1, kind: input, shape index: {}]
  %s2 = inlined_call_operand.vmem [shape: f32[2,1,128], index: 2, kind: input, shape index: {}]
  %s3 = inlined_call_operand.vmem [shape: f32[2,1,128], index: 3, kind: input, shape index: {}]
  %s4 = inlined_call_operand.vmem [shape: f32[2,16,16,128], index: 4, kind: output, shape index: {}]
  %s5 = sld [smem:[#allocation0]]
  $region63: #{upsample_block_forward.1} parent=0
    _
  %s7 = ssub.s32 1, %s5
  %s8 = scalar_select 0, %s7, %s5
  loop: start=0, step=1, limit=4
  $region2: #{upsample_block_forward.1} parent=0 // loop_pre_header
    _
  $region3: #{upsample_block_forward.1} parent=0 // loop_header
    %s10 = sphi 0, %s14
    %p11 = scmp.ge.s32.totalorder %s10, 4
    %s20 = sphi 0, %s22
    %s23 = sphi 0, %s20
    %s24 = sphi 0, %s23
    %s40 = sphi 0, %s24
    %s44 = sphi 0, %s44
    %s46 = sphi 0, %s44
    %s47 = sphi 0, %s46
    %s61 = sphi 0, %s47
    %s67 = sphi 0, %s69
    %s70 = sphi 0, %s67
    %s71 = sphi 0, %s70
    %s87 = sphi 0, %s71
    %s93 = sphi 0, %s95
    %s96 = sphi 0, %s93
    %s97 = sphi 0, %s96
    %s113 = sphi 0, %s97
    %s119 = sphi 0, %s121
    %s122 = sphi 0, %s119
    %s123 = sphi 0, %s122
    %s139 = sphi 0, %s123
  $region4: #{upsample_block_forward.1} parent=0 // loop_header_branch
    %13 = sbr.rel (%p11) target = $region8
  $region5: #{upsample_block_forward.1} parent=0 // loop_body
    %s15 = ssub.s32 %s10, 1
    %s16 = ssub.s32 %s10, 2
    %s17 = sadd.s32 %s10, 1
    %s18 = ssub.s32 %s10, %s17
    %p19 = scmp.eq.s32.totalorder %s18, 0
    %s21 = sadd.s32 %s20, 1
    %s22 = scalar_select %p19, %s20, %s21
    %p25 = pneg %p19
    %p26 = scmp.eq.s32.totalorder %s10, 1
    %p27 = por %p25, %p26
    %p28 = scmp.ne.s32.totalorder %s20, %s23
    %p29 = scmp.eq.s32.totalorder %s10, 0
    %p30 = por %p28, %p29
    %p31 = scmp.ne.s32.totalorder %s20, %s23
    %p32 = scmp.eq.s32.totalorder %s15, 1
    %p33 = por %p31, %p32
    %p34 = scmp.ne.s32.totalorder %s23, %s24
    %p35 = scmp.eq.s32.totalorder %s15, 0
    %p36 = por %p34, %p35
    %p37 = scmp.ne.s32.totalorder %s23, %s24
    %p38 = scmp.eq.s32.totalorder %s16, 1
    %p39 = por %p37, %p38
    %p41 = scmp.ne.s32.totalorder %s24, %s40
    %p42 = scmp.eq.s32.totalorder %s16, 0
    %p43 = por %p41, %p42
    %s45 = sadd.s32 %s44, 1
    %p48 = scmp.eq.s32.totalorder %s10, 1
    %p49 = scmp.ne.s32.totalorder %s44, %s46
    %p50 = scmp.eq.s32.totalorder %s10, 0
    %p51 = por %p49, %p50
    %p52 = scmp.ne.s32.totalorder %s44, %s46
    %p53 = scmp.eq.s32.totalorder %s15, 1
    %p54 = por %p52, %p53
    %p55 = scmp.ne.s32.totalorder %s46, %s47
    %p56 = scmp.eq.s32.totalorder %s15, 0
    %p57 = por %p55, %p56
    %p58 = scmp.ne.s32.totalorder %s46, %s47
    %p59 = scmp.eq.s32.totalorder %s16, 1
    %p60 = por %p58, %p59
    %p62 = scmp.ne.s32.totalorder %s47, %s61
    %p63 = scmp.eq.s32.totalorder %s16, 0
    %p64 = por %p62, %p63
    %s65 = ssub.s32 %s10, %s17
    %p66 = scmp.eq.s32.totalorder %s65, 0
    %s68 = sadd.s32 %s67, 1
    %s69 = scalar_select %p66, %s67, %s68
    %p72 = pneg %p66
    %p73 = scmp.eq.s32.totalorder %s10, 1
    %p74 = por %p72, %p73
    %p75 = scmp.ne.s32.totalorder %s67, %s70
    %p76 = scmp.eq.s32.totalorder %s10, 0
    %p77 = por %p75, %p76
    %p78 = scmp.ne.s32.totalorder %s67, %s70
    %p79 = scmp.eq.s32.totalorder %s15, 1
    %p80 = por %p78, %p79
    %p81 = scmp.ne.s32.totalorder %s70, %s71
    %p82 = scmp.eq.s32.totalorder %s15, 0
    %p83 = por %p81, %p82
    %p84 = scmp.ne.s32.totalorder %s70, %s71
    %p85 = scmp.eq.s32.totalorder %s16, 1
    %p86 = por %p84, %p85
    %p88 = scmp.ne.s32.totalorder %s71, %s87
    %p89 = scmp.eq.s32.totalorder %s16, 0
    %p90 = por %p88, %p89
    %s91 = ssub.s32 %s10, %s17
    %p92 = scmp.eq.s32.totalorder %s91, 0
    %s94 = sadd.s32 %s93, 1
    %s95 = scalar_select %p92, %s93, %s94
    %p98 = pneg %p92
    %p99 = scmp.eq.s32.totalorder %s10, 1
    %p100 = por %p98, %p99
    %p101 = scmp.ne.s32.totalorder %s93, %s96
    %p102 = scmp.eq.s32.totalorder %s10, 0
    %p103 = por %p101, %p102
    %p104 = scmp.ne.s32.totalorder %s93, %s96
    %p105 = scmp.eq.s32.totalorder %s15, 1
    %p106 = por %p104, %p105
    %p107 = scmp.ne.s32.totalorder %s96, %s97
    %p108 = scmp.eq.s32.totalorder %s15, 0
    %p109 = por %p107, %p108
    %p110 = scmp.ne.s32.totalorder %s96, %s97
    %p111 = scmp.eq.s32.totalorder %s16, 1
    %p112 = por %p110, %p111
    %p114 = scmp.ne.s32.totalorder %s97, %s113
    %p115 = scmp.eq.s32.totalorder %s16, 0
    %p116 = por %p114, %p115
    %s117 = ssub.s32 %s10, %s17
    %p118 = scmp.eq.s32.totalorder %s117, 0
    %s120 = sadd.s32 %s119, 1
    %s121 = scalar_select %p118, %s119, %s120
    %p124 = pneg %p118
    %p125 = scmp.eq.s32.totalorder %s10, 1
    %p126 = por %p124, %p125
    %p127 = scmp.ne.s32.totalorder %s119, %s122
    %p128 = scmp.eq.s32.totalorder %s10, 0
    %p129 = por %p127, %p128
    %p130 = scmp.ne.s32.totalorder %s119, %s122
    %p131 = scmp.eq.s32.totalorder %s15, 1
    %p132 = por %p130, %p131
    %p133 = scmp.ne.s32.totalorder %s122, %s123
    %p134 = scmp.eq.s32.totalorder %s15, 0
    %p135 = por %p133, %p134
    %p136 = scmp.ne.s32.totalorder %s122, %s123
    %p137 = scmp.eq.s32.totalorder %s16, 1
    %p138 = por %p136, %p137
    %p140 = scmp.ne.s32.totalorder %s123, %s139
    %p141 = scmp.eq.s32.totalorder %s16, 0
    %p142 = por %p140, %p141
    %p143 = scmp.le.s32.totalorder 1, %s10
    %p144 = scmp.lt.s32.totalorder %s10, 3
    %p145 = pnand %p143, %p144
    %p146 = pneg %p145
    // Predicated region
    $region9: #{upsample_block_forward.1} parent=5 // pred_check
      _
    $region10: #{upsample_block_forward.1} parent=5 // pred_check_branch
      %148 = sbr.rel (%p145) target = $region12
    $region11: #{upsample_block_forward.1} parent=5 // pred_region
      %s149 = ssub.s32 %s10, 1
      // Predicated region
      $region13: #{upsample_block_forward.1} parent=11 // pred_check
        %p150 = pneg %p57
      $region14: #{upsample_block_forward.1} parent=11 // pred_check_branch
        %152 = sbr.rel (%p150) target = $region16
      $region15: #{upsample_block_forward.1} parent=11 // pred_region
        _
      $region16: #{upsample_block_forward.1} parent=11 // pred_fallthru
        _
    $region12: #{upsample_block_forward.1} parent=5 // pred_fallthru
      _
    %p153 = scmp.lt.s32.totalorder %s10, 2
    // Predicated region
    $region17: #{upsample_block_forward.1} parent=5 // pred_check
      %p154 = pneg %p153
    $region18: #{upsample_block_forward.1} parent=5 // pred_check_branch
      %156 = sbr.rel (%p154) target = $region20
    $region19: #{upsample_block_forward.1} parent=5 // pred_region
      // Predicated region
      $region21: #{upsample_block_forward.1} parent=19 // pred_check
        %p157 = pneg %p30
      $region22: #{upsample_block_forward.1} parent=19 // pred_check_branch
        %159 = sbr.rel (%p157) target = $region24
      $region23: #{upsample_block_forward.1} parent=19 // pred_region
        %p160 = scmp.lt.s32.totalorder %s10, 1
        %s161 = scalar_select %p160, %s10, 1
        %s162 = smul.addr %s161, 54
        %s163 = smul.addr %s162, 8
        %s164 = scalar_lea.vmem %s0, %s163
      $region24: #{upsample_block_forward.1} parent=19 // pred_fallthru
        _
      // Predicated region
      $region25: #{upsample_block_forward.1} parent=19 // pred_check
        %p165 = pneg %p77
      $region26: #{upsample_block_forward.1} parent=19 // pred_check_branch
        %167 = sbr.rel (%p165) target = $region28
      $region27: #{upsample_block_forward.1} parent=19 // pred_region
        %p168 = scmp.lt.s32.totalorder %s10, 1
        %s169 = scalar_select %p168, %s10, 1
        %s170 = scalar_lea.vmem %s2, %s169
      $region28: #{upsample_block_forward.1} parent=19 // pred_fallthru
        _
      // Predicated region
      $region29: #{upsample_block_forward.1} parent=19 // pred_check
        %p171 = pneg %p103
      $region30: #{upsample_block_forward.1} parent=19 // pred_check_branch
        %173 = sbr.rel (%p171) target = $region32
      $region31: #{upsample_block_forward.1} parent=19 // pred_region
        %p174 = scmp.lt.s32.totalorder %s10, 1
        %s175 = scalar_select %p174, %s10, 1
        %s176 = scalar_lea.vmem %s3, %s175
      $region32: #{upsample_block_forward.1} parent=19 // pred_fallthru
        _
    $region20: #{upsample_block_forward.1} parent=5 // pred_fallthru
      _
    %p177 = scmp.le.s32.totalorder 1, %s10
    %p178 = scmp.lt.s32.totalorder %s10, 3
    %p179 = pnand %p177, %p178
    %p180 = pneg %p179
    // Predicated region
    $region33: #{upsample_block_forward.1} parent=5 // pred_check
      _
    $region34: #{upsample_block_forward.1} parent=5 // pred_check_branch
      %182 = sbr.rel (%p179) target = $region36
    $region35: #{upsample_block_forward.1} parent=5 // pred_region
      %s183 = ssub.s32 %s10, 1
      %p184 = scmp.lt.s32.totalorder %s15, 1
      %s185 = scalar_select %p184, %s15, 1
      %s186 = smul.addr %s185, 54
      %s187 = smul.addr %s186, 8
      %s188 = scalar_lea.vmem %s0, %s187
      %p189 = pneg %p36
      %p190 = pneg %p33
      %p191 = pneg %p57
      %p192 = pneg %p54
      %p193 = scmp.lt.s32.totalorder %s15, 1
      %s194 = scalar_select %p193, %s15, 1
      %s195 = scalar_lea.vmem %s2, %s194
      %p196 = pneg %p83
      %p197 = pneg %p80
      %p198 = scmp.lt.s32.totalorder %s15, 1
      %s199 = scalar_select %p198, %s15, 1
      %s200 = scalar_lea.vmem %s3, %s199
      %p201 = pneg %p109
      %p202 = pneg %p106
      %p203 = pneg %p135
      %p204 = pneg %p132
      %p205 = scmp.lt.s32.totalorder %s15, 1
      %s206 = scalar_select %p205, %s15, 1
      %s207 = smul.addr %s206, 32
      %s208 = smul.addr %s207, 8
      %s209 = scalar_lea.vmem %s4, %s208
      %p210 = scmp.lt.s32.totalorder %s15, 1
      %s211 = scalar_select %p210, %s15, 1
      %s212 = smul.addr %s211, 54
      %s213 = smul.addr %s212, 8
      %s214 = scalar_lea.vmem %s0, %s213
      %p215 = scmp.lt.s32.totalorder %s15, 1
      %s216 = scalar_select %p215, %s15, 1
      %s217 = scalar_lea.vmem %s2, %s216
      %p218 = scmp.lt.s32.totalorder %s15, 1
      %s219 = scalar_select %p218, %s15, 1
      %s220 = scalar_lea.vmem %s3, %s219
      %p221 = scmp.lt.s32.totalorder %s15, 1
      %s222 = scalar_select %p221, %s15, 1
      %s223 = smul.addr %s222, 32
      %s224 = smul.addr %s223, 8
      %s225 = scalar_lea.vmem %s4, %s224
      %226 = vst [vmem:[#allocation2] sm:$0x1] 0.0
      %227 = vst [vmem:[#allocation3] sm:$0x1] 0.0
      loop: start=0, step=1, limit=2
      $region37: #{upsample_block_forward.1} parent=35 // loop_pre_header
        _
      $region38: #{upsample_block_forward.1} parent=35 // loop_header
        %s229 = sphi 0, %s233
        %p230 = scmp.ge.s32.totalorder %s229, 2
      $region39: #{upsample_block_forward.1} parent=35 // loop_header_branch
        %232 = sbr.rel (%p230) target = $region43
      $region40: #{upsample_block_forward.1} parent=35 // loop_body
        %s234 = smul.u32 %s229, 8
        %s235 = smul.u32 %s234, 24
        %s236 = scalar_lea.vmem %s214, %s235
        %v237 = vld [vmem:[%s236] sm:$0xff]
        %v238 = vld [vmem:[%s236 + $0x8] sm:$0xff]
        %v239 = vld [vmem:[%s236 + $0x10] sm:$0x3]
        %v240 = vld [vmem:[%s236 + $0x18] sm:$0xff]
        %v241 = vld [vmem:[%s236 + $0x20] sm:$0xff]
        %v242 = vld [vmem:[%s236 + $0x28] sm:$0x3]
        %v243 = vld [vmem:[%s236 + $0x30] sm:$0xff]
        %v244 = vld [vmem:[%s236 + $0x38] sm:$0xff]
        %v245 = vld [vmem:[%s236 + $0x40] sm:$0x3]
        %v246 = vld [vmem:[%s236 + $0x48] sm:$0xff]
        %v247 = vld [vmem:[%s236 + $0x50] sm:$0xff]
        %v248 = vld [vmem:[%s236 + $0x58] sm:$0x3]
        %v249 = vld [vmem:[%s236 + $0x60] sm:$0xff]
        %v250 = vld [vmem:[%s236 + $0x68] sm:$0xff]
        %v251 = vld [vmem:[%s236 + $0x70] sm:$0x3]
        %v252 = vld [vmem:[%s236 + $0x78] sm:$0xff]
        %v253 = vld [vmem:[%s236 + $0x80] sm:$0xff]
        %v254 = vld [vmem:[%s236 + $0x88] sm:$0x3]
        %v255 = vld [vmem:[%s236 + $0x90] sm:$0xff]
        %v256 = vld [vmem:[%s236 + $0x98] sm:$0xff]
        %v257 = vld [vmem:[%s236 + $0xa0] sm:$0x3]
        %v258 = vld [vmem:[%s236 + $0xa8] sm:$0xff]
        %v259 = vld [vmem:[%s236 + $0xb0] sm:$0xff]
        %v260 = vld [vmem:[%s236 + $0xb8] sm:$0x3]
        %vm285 = vcmask 1046528
        %v286 = vrot.slane %v237, 1
        %v287 = vrot.slane %v238, 1
        %v288 = vsel %vm285, %v286, %v287
        %v289 = vrot.slane %v239, 1
        %v290 = vsel %vm285, %v287, %v289
        %v291 = vrot.slane %v240, 1
        %v292 = vrot.slane %v241, 1
        %v293 = vsel %vm285, %v291, %v292
        %v294 = vrot.slane %v242, 1
        %v295 = vsel %vm285, %v292, %v294
        %v296 = vrot.slane %v243, 1
        %v297 = vrot.slane %v244, 1
        %v298 = vsel %vm285, %v296, %v297
        %v299 = vrot.slane %v245, 1
        %v300 = vsel %vm285, %v297, %v299
        %v301 = vrot.slane %v246, 1
        %v302 = vrot.slane %v247, 1
        %v303 = vsel %vm285, %v301, %v302
        %v304 = vrot.slane %v248, 1
        %v305 = vsel %vm285, %v302, %v304
        %v306 = vrot.slane %v249, 1
        %v307 = vrot.slane %v250, 1
        %v308 = vsel %vm285, %v306, %v307
        %v309 = vrot.slane %v251, 1
        %v310 = vsel %vm285, %v307, %v309
        %v311 = vrot.slane %v252, 1
        %v312 = vrot.slane %v253, 1
        %v313 = vsel %vm285, %v311, %v312
        %v314 = vrot.slane %v254, 1
        %v315 = vsel %vm285, %v312, %v314
        %v316 = vrot.slane %v255, 1
        %v317 = vrot.slane %v256, 1
        %v318 = vsel %vm285, %v316, %v317
        %v319 = vrot.slane %v257, 1
        %v320 = vsel %vm285, %v317, %v319
        %v321 = vrot.slane %v258, 1
        %v322 = vrot.slane %v259, 1
        %v323 = vsel %vm285, %v321, %v322
        %v324 = vrot.slane %v260, 1
        %v325 = vsel %vm285, %v322, %v324
        %vm326 = vcmask 1045504
        %v327 = vrot.slane %v237, 2
        %v328 = vrot.slane %v238, 2
        %v329 = vsel %vm326, %v327, %v328
        %v330 = vrot.slane %v239, 2
        %v331 = vsel %vm326, %v328, %v330
        %v332 = vrot.slane %v240, 2
        %v333 = vrot.slane %v241, 2
        %v334 = vsel %vm326, %v332, %v333
        %v335 = vrot.slane %v242, 2
        %v336 = vsel %vm326, %v333, %v335
        %v337 = vrot.slane %v243, 2
        %v338 = vrot.slane %v244, 2
        %v339 = vsel %vm326, %v337, %v338
        %v340 = vrot.slane %v245, 2
        %v341 = vsel %vm326, %v338, %v340
        %v342 = vrot.slane %v246, 2
        %v343 = vrot.slane %v247, 2
        %v344 = vsel %vm326, %v342, %v343
        %v345 = vrot.slane %v248, 2
        %v346 = vsel %vm326, %v343, %v345
        %v347 = vrot.slane %v249, 2
        %v348 = vrot.slane %v250, 2
        %v349 = vsel %vm326, %v347, %v348
        %v350 = vrot.slane %v251, 2
        %v351 = vsel %vm326, %v348, %v350
        %v352 = vrot.slane %v252, 2
        %v353 = vrot.slane %v253, 2
        %v354 = vsel %vm326, %v352, %v353
        %v355 = vrot.slane %v254, 2
        %v356 = vsel %vm326, %v353, %v355
        %v357 = vrot.slane %v255, 2
        %v358 = vrot.slane %v256, 2
        %v359 = vsel %vm326, %v357, %v358
        %v360 = vrot.slane %v257, 2
        %v361 = vsel %vm326, %v358, %v360
        %v362 = vrot.slane %v258, 2
        %v363 = vrot.slane %v259, 2
        %v364 = vsel %vm326, %v362, %v363
        %v365 = vrot.slane %v260, 2
        %v366 = vsel %vm326, %v363, %v365
        %s367 = sadd.s32 %s234, 1
        %s368 = smul.u32 %s367, 24
        %s369 = scalar_lea.vmem %s214, %s368
        %v370 = vld [vmem:[%s369] sm:$0xff]
        %v371 = vld [vmem:[%s369 + $0x8] sm:$0xff]
        %v372 = vld [vmem:[%s369 + $0x10] sm:$0x3]
        %v373 = vld [vmem:[%s369 + $0x18] sm:$0xff]
        %v374 = vld [vmem:[%s369 + $0x20] sm:$0xff]
        %v375 = vld [vmem:[%s369 + $0x28] sm:$0x3]
        %v376 = vld [vmem:[%s369 + $0x30] sm:$0xff]
        %v377 = vld [vmem:[%s369 + $0x38] sm:$0xff]
        %v378 = vld [vmem:[%s369 + $0x40] sm:$0x3]
        %v379 = vld [vmem:[%s369 + $0x48] sm:$0xff]
        %v380 = vld [vmem:[%s369 + $0x50] sm:$0xff]
        %v381 = vld [vmem:[%s369 + $0x58] sm:$0x3]
        %v382 = vld [vmem:[%s369 + $0x60] sm:$0xff]
        %v383 = vld [vmem:[%s369 + $0x68] sm:$0xff]
        %v384 = vld [vmem:[%s369 + $0x70] sm:$0x3]
        %v385 = vld [vmem:[%s369 + $0x78] sm:$0xff]
        %v386 = vld [vmem:[%s369 + $0x80] sm:$0xff]
        %v387 = vld [vmem:[%s369 + $0x88] sm:$0x3]
        %v388 = vld [vmem:[%s369 + $0x90] sm:$0xff]
        %v389 = vld [vmem:[%s369 + $0x98] sm:$0xff]
        %v390 = vld [vmem:[%s369 + $0xa0] sm:$0x3]
        %v391 = vld [vmem:[%s369 + $0xa8] sm:$0xff]
        %v392 = vld [vmem:[%s369 + $0xb0] sm:$0xff]
        %v393 = vld [vmem:[%s369 + $0xb8] sm:$0x3]
        %v418 = vrot.slane %v370, 1
        %v419 = vrot.slane %v371, 1
        %v420 = vsel %vm285, %v418, %v419
        %v421 = vrot.slane %v372, 1
        %v422 = vsel %vm285, %v419, %v421
        %v423 = vrot.slane %v373, 1
        %v424 = vrot.slane %v374, 1
        %v425 = vsel %vm285, %v423, %v424
        %v426 = vrot.slane %v375, 1
        %v427 = vsel %vm285, %v424, %v426
        %v428 = vrot.slane %v376, 1
        %v429 = vrot.slane %v377, 1
        %v430 = vsel %vm285, %v428, %v429
        %v431 = vrot.slane %v378, 1
        %v432 = vsel %vm285, %v429, %v431
        %v433 = vrot.slane %v379, 1
        %v434 = vrot.slane %v380, 1
        %v435 = vsel %vm285, %v433, %v434
        %v436 = vrot.slane %v381, 1
        %v437 = vsel %vm285, %v434, %v436
        %v438 = vrot.slane %v382, 1
        %v439 = vrot.slane %v383, 1
        %v440 = vsel %vm285, %v438, %v439
        %v441 = vrot.slane %v384, 1
        %v442 = vsel %vm285, %v439, %v441
        %v443 = vrot.slane %v385, 1
        %v444 = vrot.slane %v386, 1
        %v445 = vsel %vm285, %v443, %v444
        %v446 = vrot.slane %v387, 1
        %v447 = vsel %vm285, %v444, %v446
        %v448 = vrot.slane %v388, 1
        %v449 = vrot.slane %v389, 1
        %v450 = vsel %vm285, %v448, %v449
        %v451 = vrot.slane %v390, 1
        %v452 = vsel %vm285, %v449, %v451
        %v453 = vrot.slane %v391, 1
        %v454 = vrot.slane %v392, 1
        %v455 = vsel %vm285, %v453, %v454
        %v456 = vrot.slane %v393, 1
        %v457 = vsel %vm285, %v454, %v456
        %v474 = vrot.slane %v370, 2
        %v475 = vrot.slane %v371, 2
        %v476 = vsel %vm326, %v474, %v475
        %v477 = vrot.slane %v372, 2
        %v478 = vsel %vm326, %v475, %v477
        %v479 = vrot.slane %v373, 2
        %v480 = vrot.slane %v374, 2
        %v481 = vsel %vm326, %v479, %v480
        %v482 = vrot.slane %v375, 2
        %v483 = vsel %vm326, %v480, %v482
        %v484 = vrot.slane %v376, 2
        %v485 = vrot.slane %v377, 2
        %v486 = vsel %vm326, %v484, %v485
        %v487 = vrot.slane %v378, 2
        %v488 = vsel %vm326, %v485, %v487
        %v489 = vrot.slane %v379, 2
        %v490 = vrot.slane %v380, 2
        %v491 = vsel %vm326, %v489, %v490
        %v492 = vrot.slane %v381, 2
        %v493 = vsel %vm326, %v490, %v492
        %v494 = vrot.slane %v382, 2
        %v495 = vrot.slane %v383, 2
        %v496 = vsel %vm326, %v494, %v495
        %v497 = vrot.slane %v384, 2
        %v498 = vsel %vm326, %v495, %v497
        %v499 = vrot.slane %v385, 2
        %v500 = vrot.slane %v386, 2
        %v501 = vsel %vm326, %v499, %v500
        %v502 = vrot.slane %v387, 2
        %v503 = vsel %vm326, %v500, %v502
        %v504 = vrot.slane %v388, 2
        %v505 = vrot.slane %v389, 2
        %v506 = vsel %vm326, %v504, %v505
        %v507 = vrot.slane %v390, 2
        %v508 = vsel %vm326, %v505, %v507
        %v509 = vrot.slane %v391, 2
        %v510 = vrot.slane %v392, 2
        %v511 = vsel %vm326, %v509, %v510
        %v512 = vrot.slane %v393, 2
        %v513 = vsel %vm326, %v510, %v512
        %s514 = sadd.s32 %s234, 2
        %s515 = smul.u32 %s514, 24
        %s516 = scalar_lea.vmem %s214, %s515
        %v517 = vld [vmem:[%s516] sm:$0xff]
        %v518 = vld [vmem:[%s516 + $0x8] sm:$0xff]
        %v519 = vld [vmem:[%s516 + $0x10] sm:$0x3]
        %v520 = vld [vmem:[%s516 + $0x18] sm:$0xff]
        %v521 = vld [vmem:[%s516 + $0x20] sm:$0xff]
        %v522 = vld [vmem:[%s516 + $0x28] sm:$0x3]
        %v523 = vld [vmem:[%s516 + $0x30] sm:$0xff]
        %v524 = vld [vmem:[%s516 + $0x38] sm:$0xff]
        %v525 = vld [vmem:[%s516 + $0x40] sm:$0x3]
        %v526 = vld [vmem:[%s516 + $0x48] sm:$0xff]
        %v527 = vld [vmem:[%s516 + $0x50] sm:$0xff]
        %v528 = vld [vmem:[%s516 + $0x58] sm:$0x3]
        %v529 = vld [vmem:[%s516 + $0x60] sm:$0xff]
        %v530 = vld [vmem:[%s516 + $0x68] sm:$0xff]
        %v531 = vld [vmem:[%s516 + $0x70] sm:$0x3]
        %v532 = vld [vmem:[%s516 + $0x78] sm:$0xff]
        %v533 = vld [vmem:[%s516 + $0x80] sm:$0xff]
        %v534 = vld [vmem:[%s516 + $0x88] sm:$0x3]
        %v535 = vld [vmem:[%s516 + $0x90] sm:$0xff]
        %v536 = vld [vmem:[%s516 + $0x98] sm:$0xff]
        %v537 = vld [vmem:[%s516 + $0xa0] sm:$0x3]
        %v538 = vld [vmem:[%s516 + $0xa8] sm:$0xff]
        %v539 = vld [vmem:[%s516 + $0xb0] sm:$0xff]
        %v540 = vld [vmem:[%s516 + $0xb8] sm:$0x3]
        %v565 = vrot.slane %v517, 1
        %v566 = vrot.slane %v518, 1
        %v567 = vsel %vm285, %v565, %v566
        %v568 = vrot.slane %v519, 1
        %v569 = vsel %vm285, %v566, %v568
        %v570 = vrot.slane %v520, 1
        %v571 = vrot.slane %v521, 1
        %v572 = vsel %vm285, %v570, %v571
        %v573 = vrot.slane %v522, 1
        %v574 = vsel %vm285, %v571, %v573
        %v575 = vrot.slane %v523, 1
        %v576 = vrot.slane %v524, 1
        %v577 = vsel %vm285, %v575, %v576
        %v578 = vrot.slane %v525, 1
        %v579 = vsel %vm285, %v576, %v578
        %v580 = vrot.slane %v526, 1
        %v581 = vrot.slane %v527, 1
        %v582 = vsel %vm285, %v580, %v581
        %v583 = vrot.slane %v528, 1
        %v584 = vsel %vm285, %v581, %v583
        %v585 = vrot.slane %v529, 1
        %v586 = vrot.slane %v530, 1
        %v587 = vsel %vm285, %v585, %v586
        %v588 = vrot.slane %v531, 1
        %v589 = vsel %vm285, %v586, %v588
        %v590 = vrot.slane %v532, 1
        %v591 = vrot.slane %v533, 1
        %v592 = vsel %vm285, %v590, %v591
        %v593 = vrot.slane %v534, 1
        %v594 = vsel %vm285, %v591, %v593
        %v595 = vrot.slane %v535, 1
        %v596 = vrot.slane %v536, 1
        %v597 = vsel %vm285, %v595, %v596
        %v598 = vrot.slane %v537, 1
        %v599 = vsel %vm285, %v596, %v598
        %v600 = vrot.slane %v538, 1
        %v601 = vrot.slane %v539, 1
        %v602 = vsel %vm285, %v600, %v601
        %v603 = vrot.slane %v540, 1
        %v604 = vsel %vm285, %v601, %v603
        %v605 = vrot.slane %v517, 2
        %v606 = vrot.slane %v518, 2
        %v607 = vsel %vm326, %v605, %v606
        %v608 = vrot.slane %v519, 2
        %v609 = vsel %vm326, %v606, %v608
        %v610 = vrot.slane %v520, 2
        %v611 = vrot.slane %v521, 2
        %v612 = vsel %vm326, %v610, %v611
        %v613 = vrot.slane %v522, 2
        %v614 = vsel %vm326, %v611, %v613
        %v615 = vrot.slane %v523, 2
        %v616 = vrot.slane %v524, 2
        %v617 = vsel %vm326, %v615, %v616
        %v618 = vrot.slane %v525, 2
        %v619 = vsel %vm326, %v616, %v618
        %v620 = vrot.slane %v526, 2
        %v621 = vrot.slane %v527, 2
        %v622 = vsel %vm326, %v620, %v621
        %v623 = vrot.slane %v528, 2
        %v624 = vsel %vm326, %v621, %v623
        %v625 = vrot.slane %v529, 2
        %v626 = vrot.slane %v530, 2
        %v627 = vsel %vm326, %v625, %v626
        %v628 = vrot.slane %v531, 2
        %v629 = vsel %vm326, %v626, %v628
        %v630 = vrot.slane %v532, 2
        %v631 = vrot.slane %v533, 2
        %v632 = vsel %vm326, %v630, %v631
        %v633 = vrot.slane %v534, 2
        %v634 = vsel %vm326, %v631, %v633
        %v635 = vrot.slane %v535, 2
        %v636 = vrot.slane %v536, 2
        %v637 = vsel %vm326, %v635, %v636
        %v638 = vrot.slane %v537, 2
        %v639 = vsel %vm326, %v636, %v638
        %v640 = vrot.slane %v538, 2
        %v641 = vrot.slane %v539, 2
        %v642 = vsel %vm326, %v640, %v641
        %v643 = vrot.slane %v540, 2
        %v644 = vsel %vm326, %v641, %v643
        %645 = vrot.lane.b32.xlu0 %v288, 32
        %v646 = vpop.permute.xlu0 %645
        %647 = vrot.lane.b32.xlu0 %v290, 32
        %v648 = vpop.permute.xlu0 %647
        %649 = vrot.lane.b32.xlu0 %v293, 32
        %v650 = vpop.permute.xlu0 %649
        %651 = vrot.lane.b32.xlu0 %v295, 32
        %v652 = vpop.permute.xlu0 %651
        %653 = vrot.lane.b32.xlu0 %v298, 32
        %v654 = vpop.permute.xlu0 %653
        %655 = vrot.lane.b32.xlu0 %v300, 32
        %v656 = vpop.permute.xlu0 %655
        %657 = vrot.lane.b32.xlu0 %v303, 32
        %v658 = vpop.permute.xlu0 %657
        %659 = vrot.lane.b32.xlu0 %v305, 32
        %v660 = vpop.permute.xlu0 %659
        %661 = vrot.lane.b32.xlu0 %v308, 32
        %v662 = vpop.permute.xlu0 %661
        %663 = vrot.lane.b32.xlu0 %v310, 32
        %v664 = vpop.permute.xlu0 %663
        %665 = vrot.lane.b32.xlu0 %v313, 32
        %v666 = vpop.permute.xlu0 %665
        %667 = vrot.lane.b32.xlu0 %v315, 32
        %v668 = vpop.permute.xlu0 %667
        %669 = vrot.lane.b32.xlu0 %v318, 32
        %v670 = vpop.permute.xlu0 %669
        %671 = vrot.lane.b32.xlu0 %v320, 32
        %v672 = vpop.permute.xlu0 %671
        %673 = vrot.lane.b32.xlu0 %v323, 32
        %v674 = vpop.permute.xlu0 %673
        %675 = vrot.lane.b32.xlu0 %v325, 32
        %v676 = vpop.permute.xlu0 %675
        %693 = vrot.lane.b32.xlu0 %v329, 64
        %v694 = vpop.permute.xlu0 %693
        %695 = vrot.lane.b32.xlu0 %v331, 64
        %v696 = vpop.permute.xlu0 %695
        %697 = vrot.lane.b32.xlu0 %v334, 64
        %v698 = vpop.permute.xlu0 %697
        %699 = vrot.lane.b32.xlu0 %v336, 64
        %v700 = vpop.permute.xlu0 %699
        %701 = vrot.lane.b32.xlu0 %v339, 64
        %v702 = vpop.permute.xlu0 %701
        %703 = vrot.lane.b32.xlu0 %v341, 64
        %v704 = vpop.permute.xlu0 %703
        %705 = vrot.lane.b32.xlu0 %v344, 64
        %v706 = vpop.permute.xlu0 %705
        %707 = vrot.lane.b32.xlu0 %v346, 64
        %v708 = vpop.permute.xlu0 %707
        %709 = vrot.lane.b32.xlu0 %v349, 64
        %v710 = vpop.permute.xlu0 %709
        %711 = vrot.lane.b32.xlu0 %v351, 64
        %v712 = vpop.permute.xlu0 %711
        %713 = vrot.lane.b32.xlu0 %v354, 64
        %v714 = vpop.permute.xlu0 %713
        %715 = vrot.lane.b32.xlu0 %v356, 64
        %v716 = vpop.permute.xlu0 %715
        %717 = vrot.lane.b32.xlu0 %v359, 64
        %v718 = vpop.permute.xlu0 %717
        %719 = vrot.lane.b32.xlu0 %v361, 64
        %v720 = vpop.permute.xlu0 %719
        %721 = vrot.lane.b32.xlu0 %v364, 64
        %v722 = vpop.permute.xlu0 %721
        %723 = vrot.lane.b32.xlu0 %v366, 64
        %v724 = vpop.permute.xlu0 %723
        %741 = vrot.lane.b32.xlu0 %v370, 96
        %v742 = vpop.permute.xlu0 %741
        %743 = vrot.lane.b32.xlu0 %v371, 96
        %v744 = vpop.permute.xlu0 %743
        %745 = vrot.lane.b32.xlu0 %v373, 96
        %v746 = vpop.permute.xlu0 %745
        %747 = vrot.lane.b32.xlu0 %v374, 96
        %v748 = vpop.permute.xlu0 %747
        %749 = vrot.lane.b32.xlu0 %v376, 96
        %v750 = vpop.permute.xlu0 %749
        %751 = vrot.lane.b32.xlu0 %v377, 96
        %v752 = vpop.permute.xlu0 %751
        %753 = vrot.lane.b32.xlu0 %v379, 96
        %v754 = vpop.permute.xlu0 %753
        %755 = vrot.lane.b32.xlu0 %v380, 96
        %v756 = vpop.permute.xlu0 %755
        %757 = vrot.lane.b32.xlu0 %v382, 96
        %v758 = vpop.permute.xlu0 %757
        %759 = vrot.lane.b32.xlu0 %v383, 96
        %v760 = vpop.permute.xlu0 %759
        %761 = vrot.lane.b32.xlu0 %v385, 96
        %v762 = vpop.permute.xlu0 %761
        %763 = vrot.lane.b32.xlu0 %v386, 96
        %v764 = vpop.permute.xlu0 %763
        %765 = vrot.lane.b32.xlu0 %v388, 96
        %v766 = vpop.permute.xlu0 %765
        %767 = vrot.lane.b32.xlu0 %v389, 96
        %v768 = vpop.permute.xlu0 %767
        %769 = vrot.lane.b32.xlu0 %v391, 96
        %v770 = vpop.permute.xlu0 %769
        %771 = vrot.lane.b32.xlu0 %v392, 96
        %v772 = vpop.permute.xlu0 %771
        %789 = vrot.lane.b32.xlu0 %v476, 32
        %v790 = vpop.permute.xlu0 %789
        %791 = vrot.lane.b32.xlu0 %v478, 32
        %v792 = vpop.permute.xlu0 %791
        %793 = vrot.lane.b32.xlu0 %v481, 32
        %v794 = vpop.permute.xlu0 %793
        %795 = vrot.lane.b32.xlu0 %v483, 32
        %v796 = vpop.permute.xlu0 %795
        %797 = vrot.lane.b32.xlu0 %v486, 32
        %v798 = vpop.permute.xlu0 %797
        %799 = vrot.lane.b32.xlu0 %v488, 32
        %v800 = vpop.permute.xlu0 %799
        %801 = vrot.lane.b32.xlu0 %v491, 32
        %v802 = vpop.permute.xlu0 %801
        %803 = vrot.lane.b32.xlu0 %v493, 32
        %v804 = vpop.permute.xlu0 %803
        %805 = vrot.lane.b32.xlu0 %v496, 32
        %v806 = vpop.permute.xlu0 %805
        %807 = vrot.lane.b32.xlu0 %v498, 32
        %v808 = vpop.permute.xlu0 %807
        %809 = vrot.lane.b32.xlu0 %v501, 32
        %v810 = vpop.permute.xlu0 %809
        %811 = vrot.lane.b32.xlu0 %v503, 32
        %v812 = vpop.permute.xlu0 %811
        %813 = vrot.lane.b32.xlu0 %v506, 32
        %v814 = vpop.permute.xlu0 %813
        %815 = vrot.lane.b32.xlu0 %v508, 32
        %v816 = vpop.permute.xlu0 %815
        %817 = vrot.lane.b32.xlu0 %v511, 32
        %v818 = vpop.permute.xlu0 %817
        %819 = vrot.lane.b32.xlu0 %v513, 32
        %v820 = vpop.permute.xlu0 %819
        %837 = vrot.lane.b32.xlu0 %v517, 64
        %v838 = vpop.permute.xlu0 %837
        %839 = vrot.lane.b32.xlu0 %v518, 64
        %v840 = vpop.permute.xlu0 %839
        %841 = vrot.lane.b32.xlu0 %v520, 64
        %v842 = vpop.permute.xlu0 %841
        %843 = vrot.lane.b32.xlu0 %v521, 64
        %v844 = vpop.permute.xlu0 %843
        %845 = vrot.lane.b32.xlu0 %v523, 64
        %v846 = vpop.permute.xlu0 %845
        %847 = vrot.lane.b32.xlu0 %v524, 64
        %v848 = vpop.permute.xlu0 %847
        %849 = vrot.lane.b32.xlu0 %v526, 64
        %v850 = vpop.permute.xlu0 %849
        %851 = vrot.lane.b32.xlu0 %v527, 64
        %v852 = vpop.permute.xlu0 %851
        %853 = vrot.lane.b32.xlu0 %v529, 64
        %v854 = vpop.permute.xlu0 %853
        %855 = vrot.lane.b32.xlu0 %v530, 64
        %v856 = vpop.permute.xlu0 %855
        %857 = vrot.lane.b32.xlu0 %v532, 64
        %v858 = vpop.permute.xlu0 %857
        %859 = vrot.lane.b32.xlu0 %v533, 64
        %v860 = vpop.permute.xlu0 %859
        %861 = vrot.lane.b32.xlu0 %v535, 64
        %v862 = vpop.permute.xlu0 %861
        %863 = vrot.lane.b32.xlu0 %v536, 64
        %v864 = vpop.permute.xlu0 %863
        %865 = vrot.lane.b32.xlu0 %v538, 64
        %v866 = vpop.permute.xlu0 %865
        %867 = vrot.lane.b32.xlu0 %v539, 64
        %v868 = vpop.permute.xlu0 %867
        %885 = vrot.lane.b32.xlu0 %v567, 96
        %v886 = vpop.permute.xlu0 %885
        %887 = vrot.lane.b32.xlu0 %v569, 96
        %v888 = vpop.permute.xlu0 %887
        %889 = vrot.lane.b32.xlu0 %v572, 96
        %v890 = vpop.permute.xlu0 %889
        %891 = vrot.lane.b32.xlu0 %v574, 96
        %v892 = vpop.permute.xlu0 %891
        %893 = vrot.lane.b32.xlu0 %v577, 96
        %v894 = vpop.permute.xlu0 %893
        %895 = vrot.lane.b32.xlu0 %v579, 96
        %v896 = vpop.permute.xlu0 %895
        %897 = vrot.lane.b32.xlu0 %v582, 96
        %v898 = vpop.permute.xlu0 %897
        %899 = vrot.lane.b32.xlu0 %v584, 96
        %v900 = vpop.permute.xlu0 %899
        %901 = vrot.lane.b32.xlu0 %v587, 96
        %v902 = vpop.permute.xlu0 %901
        %903 = vrot.lane.b32.xlu0 %v589, 96
        %v904 = vpop.permute.xlu0 %903
        %905 = vrot.lane.b32.xlu0 %v592, 96
        %v906 = vpop.permute.xlu0 %905
        %907 = vrot.lane.b32.xlu0 %v594, 96
        %v908 = vpop.permute.xlu0 %907
        %909 = vrot.lane.b32.xlu0 %v597, 96
        %v910 = vpop.permute.xlu0 %909
        %911 = vrot.lane.b32.xlu0 %v599, 96
        %v912 = vpop.permute.xlu0 %911
        %913 = vrot.lane.b32.xlu0 %v602, 96
        %v914 = vpop.permute.xlu0 %913
        %915 = vrot.lane.b32.xlu0 %v604, 96
        %v916 = vpop.permute.xlu0 %915
        %vm933 = vcmask 261120
        %v934 = vsel %vm933, %v237, %v646
        %v935 = vsel %vm933, %v238, %v648
        %v936 = vsel %vm933, %v240, %v650
        %v937 = vsel %vm933, %v241, %v652
        %v938 = vsel %vm933, %v243, %v654
        %v939 = vsel %vm933, %v244, %v656
        %v940 = vsel %vm933, %v246, %v658
        %v941 = vsel %vm933, %v247, %v660
        %v942 = vsel %vm933, %v249, %v662
        %v943 = vsel %vm933, %v250, %v664
        %v944 = vsel %vm933, %v252, %v666
        %v945 = vsel %vm933, %v253, %v668
        %v946 = vsel %vm933, %v255, %v670
        %v947 = vsel %vm933, %v256, %v672
        %v948 = vsel %vm933, %v258, %v674
        %v949 = vsel %vm933, %v259, %v676
        %vm950 = vcmask 523264
        %v951 = vsel %vm950, %v934, %v694
        %v952 = vsel %vm950, %v935, %v696
        %v953 = vsel %vm950, %v936, %v698
        %v954 = vsel %vm950, %v937, %v700
        %v955 = vsel %vm950, %v938, %v702
        %v956 = vsel %vm950, %v939, %v704
        %v957 = vsel %vm950, %v940, %v706
        %v958 = vsel %vm950, %v941, %v708
        %v959 = vsel %vm950, %v942, %v710
        %v960 = vsel %vm950, %v943, %v712
        %v961 = vsel %vm950, %v944, %v714
        %v962 = vsel %vm950, %v945, %v716
        %v963 = vsel %vm950, %v946, %v718
        %v964 = vsel %vm950, %v947, %v720
        %v965 = vsel %vm950, %v948, %v722
        %v966 = vsel %vm950, %v949, %v724
        %vm967 = vcmask 785408
        %v968 = vsel %vm967, %v951, %v742
        %v969 = vsel %vm967, %v952, %v744
        %v970 = vsel %vm967, %v953, %v746
        %v971 = vsel %vm967, %v954, %v748
        %v972 = vsel %vm967, %v955, %v750
        %v973 = vsel %vm967, %v956, %v752
        %v974 = vsel %vm967, %v957, %v754
        %v975 = vsel %vm967, %v958, %v756
        %v976 = vsel %vm967, %v959, %v758
        %v977 = vsel %vm967, %v960, %v760
        %v978 = vsel %vm967, %v961, %v762
        %v979 = vsel %vm967, %v962, %v764
        %v980 = vsel %vm967, %v963, %v766
        %v981 = vsel %vm967, %v964, %v768
        %v982 = vsel %vm967, %v965, %v770
        %v983 = vsel %vm967, %v966, %v772
        %v984 = vsel %vm933, %v420, %v790
        %v985 = vsel %vm933, %v422, %v792
        %v986 = vsel %vm933, %v425, %v794
        %v987 = vsel %vm933, %v427, %v796
        %v988 = vsel %vm933, %v430, %v798
        %v989 = vsel %vm933, %v432, %v800
        %v990 = vsel %vm933, %v435, %v802
        %v991 = vsel %vm933, %v437, %v804
        %v992 = vsel %vm933, %v440, %v806
        %v993 = vsel %vm933, %v442, %v808
        %v994 = vsel %vm933, %v445, %v810
        %v995 = vsel %vm933, %v447, %v812
        %v996 = vsel %vm933, %v450, %v814
        %v997 = vsel %vm933, %v452, %v816
        %v998 = vsel %vm933, %v455, %v818
        %v999 = vsel %vm933, %v457, %v820
        %v1000 = vsel %vm950, %v984, %v838
        %v1001 = vsel %vm950, %v985, %v840
        %v1002 = vsel %vm950, %v986, %v842
        %v1003 = vsel %vm950, %v987, %v844
        %v1004 = vsel %vm950, %v988, %v846
        %v1005 = vsel %vm950, %v989, %v848
        %v1006 = vsel %vm950, %v990, %v850
        %v1007 = vsel %vm950, %v991, %v852
        %v1008 = vsel %vm950, %v992, %v854
        %v1009 = vsel %vm950, %v993, %v856
        %v1010 = vsel %vm950, %v994, %v858
        %v1011 = vsel %vm950, %v995, %v860
        %v1012 = vsel %vm950, %v996, %v862
        %v1013 = vsel %vm950, %v997, %v864
        %v1014 = vsel %vm950, %v998, %v866
        %v1015 = vsel %vm950, %v999, %v868
        %v1016 = vsel %vm967, %v1000, %v886
        %v1017 = vsel %vm967, %v1001, %v888
        %v1018 = vsel %vm967, %v1002, %v890
        %v1019 = vsel %vm967, %v1003, %v892
        %v1020 = vsel %vm967, %v1004, %v894
        %v1021 = vsel %vm967, %v1005, %v896
        %v1022 = vsel %vm967, %v1006, %v898
        %v1023 = vsel %vm967, %v1007, %v900
        %v1024 = vsel %vm967, %v1008, %v902
        %v1025 = vsel %vm967, %v1009, %v904
        %v1026 = vsel %vm967, %v1010, %v906
        %v1027 = vsel %vm967, %v1011, %v908
        %v1028 = vsel %vm967, %v1012, %v910
        %v1029 = vsel %vm967, %v1013, %v912
        %v1030 = vsel %vm967, %v1014, %v914
        %v1031 = vsel %vm967, %v1015, %v916
        %v1032 = vld [vmem:[%s1] sm:$0xff]
        %v1033 = vld [vmem:[%s1 + $0x8] sm:$0xff]
        %v1034 = vld [vmem:[%s1 + $0x10] sm:$0xff]
        %v1035 = vld [vmem:[%s1 + $0x18] sm:$0xff]
        %v1036 = vld [vmem:[%s1 + $0x20] sm:$0xff]
        %v1037 = vld [vmem:[%s1 + $0x28] sm:$0xff]
        %v1038 = vld [vmem:[%s1 + $0x30] sm:$0xff]
        %v1039 = vld [vmem:[%s1 + $0x38] sm:$0xff]
        %v1040 = vld [vmem:[%s1 + $0x40] sm:$0xff]
        %v1041 = vld [vmem:[%s1 + $0x48] sm:$0xff]
        %v1042 = vld [vmem:[%s1 + $0x50] sm:$0xff]
        %v1043 = vld [vmem:[%s1 + $0x58] sm:$0xff]
        %v1044 = vld [vmem:[%s1 + $0x60] sm:$0xff]
        %v1045 = vld [vmem:[%s1 + $0x68] sm:$0xff]
        %v1046 = vld [vmem:[%s1 + $0x70] sm:$0xff]
        %v1047 = vld [vmem:[%s1 + $0x78] sm:$0xff]
        %v1048 = vld [vmem:[%s1 + $0x80] sm:$0xff]
        %v1049 = vld [vmem:[%s1 + $0x88] sm:$0xff]
        %v1050 = vld [vmem:[%s1 + $0x90] sm:$0xff]
        %v1051 = vld [vmem:[%s1 + $0x98] sm:$0xff]
        %v1052 = vld [vmem:[%s1 + $0xa0] sm:$0xff]
        %v1053 = vld [vmem:[%s1 + $0xa8] sm:$0xff]
        %v1054 = vld [vmem:[%s1 + $0xb0] sm:$0xff]
        %v1055 = vld [vmem:[%s1 + $0xb8] sm:$0xff]
        %v1056 = vld [vmem:[%s1 + $0xc0] sm:$0xff]
        %v1057 = vld [vmem:[%s1 + $0xc8] sm:$0xff]
        %v1058 = vld [vmem:[%s1 + $0xd0] sm:$0xff]
        %v1059 = vld [vmem:[%s1 + $0xd8] sm:$0xff]
        %v1060 = vld [vmem:[%s1 + $0xe0] sm:$0xff]
        %v1061 = vld [vmem:[%s1 + $0xe8] sm:$0xff]
        %v1062 = vld [vmem:[%s1 + $0xf0] sm:$0xff]
        %v1063 = vld [vmem:[%s1 + $0xf8] sm:$0xff]
        %v1064 = vld [vmem:[%s1 + $0x100] sm:$0xff]
        %v1065 = vld [vmem:[%s1 + $0x108] sm:$0xff]
        %v1066 = vld [vmem:[%s1 + $0x110] sm:$0xff]
        %v1067 = vld [vmem:[%s1 + $0x118] sm:$0xff]
        %v1068 = vsel %vm933, %v607, 0
        %v1070 = vsel %vm933, %v609, 0
        %v1072 = vsel %vm933, %v612, 0
        %v1074 = vsel %vm933, %v614, 0
        %v1076 = vsel %vm933, %v617, 0
        %v1078 = vsel %vm933, %v619, 0
        %v1080 = vsel %vm933, %v622, 0
        %v1082 = vsel %vm933, %v624, 0
        %v1084 = vsel %vm933, %v627, 0
        %v1086 = vsel %vm933, %v629, 0
        %v1088 = vsel %vm933, %v632, 0
        %v1090 = vsel %vm933, %v634, 0
        %v1092 = vsel %vm933, %v637, 0
        %v1094 = vsel %vm933, %v639, 0
        %v1096 = vsel %vm933, %v642, 0
        %v1098 = vsel %vm933, %v644, 0
        %1100 = vmatprep.subr.mxu0 0.0
        %1101 = vmatpush1.msra.mxu0 %v1032
        %1102 = vmatprep.subr.mxu0 0.0
        %1103 = vmatpush1.msra.mxu0 %v1033
        %1104 = vmatprep.subr.mxu0 0.0
        %1105 = vmatpush1.msra.mxu0 %v1034
        %1106 = vmatprep.subr.mxu0 0.0
        %1107 = vmatpush1.msra.mxu0 %v1035
        %1108 = vmatprep.subr.mxu0 0.0
        %1109 = vmatpush1.msra.mxu0 %v1036
        %1110 = vmatprep.subr.mxu0 0.0
        %1111 = vmatpush1.msra.mxu0 %v1037
        %1112 = vmatprep.subr.mxu0 0.0
        %1113 = vmatpush1.msra.mxu0 %v1038
        %1114 = vmatprep.subr.mxu0 0.0
        %1115 = vmatpush1.msra.mxu0 %v1039
        %1116 = vmatprep.subr.mxu0 0.0
        %1117 = vmatpush1.msra.mxu0 %v1040
        %1118 = vmatprep.subr.mxu0 0.0
        %1119 = vmatpush1.msra.mxu0 %v1041
        %1120 = vmatprep.subr.mxu0 0.0
        %1121 = vmatpush1.msra.mxu0 %v1042
        %1122 = vmatprep.subr.mxu0 0.0
        %1123 = vmatpush1.msra.mxu0 %v1043
        %1124 = vmatprep.subr.mxu0 0.0
        %1125 = vmatpush1.msra.mxu0 %v1044
        %1126 = vmatprep.subr.mxu0 0.0
        %1127 = vmatpush1.msra.mxu0 %v1045
        %1128 = vmatprep.subr.mxu0 0.0
        %1129 = vmatpush1.msra.mxu0 %v1046
        %1130 = vmatprep.subr.mxu0 0.0
        %1131 = vmatpush1.msra.mxu0 %v1047
        %1132 = vmatprep.subr.mxu0 0.0
        %1133 = vmatpush1.msra.mxu0 %v1048
        %1134 = vmatprep.subr.mxu0 0.0
        %1135 = vmatpush1.msra.mxu0 %v1049
        %1136 = vmatprep.subr.mxu0 0.0
        %1137 = vmatpush1.msra.mxu0 %v1050
        %1138 = vmatprep.subr.mxu0 0.0
        %1139 = vmatpush1.msra.mxu0 %v1051
        %1140 = vmatprep.subr.mxu0 0.0
        %1141 = vmatpush1.msra.mxu0 %v1052
        %1142 = vmatprep.subr.mxu0 0.0
        %1143 = vmatpush1.msra.mxu0 %v1053
        %1144 = vmatprep.subr.mxu0 0.0
        %1145 = vmatpush1.msra.mxu0 %v1054
        %1146 = vmatprep.subr.mxu0 0.0
        %1147 = vmatpush1.msra.mxu0 %v1055
        %1148 = vmatprep.subr.mxu0 0.0
        %1149 = vmatpush1.msra.mxu0 %v1056
        %1150 = vmatprep.subr.mxu0 0.0
        %1151 = vmatpush1.msra.mxu0 %v1057
        %1152 = vmatprep.subr.mxu0 0.0
        %1153 = vmatpush1.msra.mxu0 %v1058
        %1154 = vmatprep.subr.mxu0 0.0
        %1155 = vmatpush1.msra.mxu0 %v1059
        %1156 = vmatprep.subr.mxu0 0.0
        %1157 = vmatpush1.msra.mxu0 %v1060
        %1158 = vmatprep.subr.mxu0 0.0
        %1159 = vmatpush1.msra.mxu0 %v1061
        %1160 = vmatprep.subr.mxu0 0.0
        %1161 = vmatpush1.msra.mxu0 %v1062
        %1162 = vmatprep.subr.mxu0 0.0
        %1163 = vmatpush1.msra.mxu0 %v1063
        %1164 = vmatprep.mubr.f32.mxu0 %v1016
        %1165 = vmatmul.mubr.f32.gmra.mrb[0].mxu0 %v968
        %v1166 = vpop.f32.mrb[0].mxu0
        %v1167 = vadd.f32 0.0, %v1166
        %v1168 = vpop.f32.mrb[0].mxu0
        %1169 = vmatprep.mubr.f32.mxu0 %v1017
        %1170 = vmatmul.mubr.f32.gmra.mrb[0].mxu0 %v969
        %v1171 = vpop.f32.mrb[0].mxu0
        %v1172 = vadd.f32 0.0, %v1171
        %v1173 = vpop.f32.mrb[0].mxu0
        %1174 = vmatprep.mubr.f32.mxu0 %v1018
        %1175 = vmatmul.mubr.f32.gmra.mrb[0].mxu0 %v970
        %v1176 = vpop.f32.mrb[0].mxu0
        %v1177 = vadd.f32 0.0, %v1176
        %v1178 = vpop.f32.mrb[0].mxu0
        %1179 = vmatprep.mubr.f32.mxu0 %v1019
        %1180 = vmatmul.mubr.f32.gmra.mrb[0].mxu0 %v971
        %v1181 = vpop.f32.mrb[0].mxu0
        %v1182 = vadd.f32 0.0, %v1181
        %v1183 = vpop.f32.mrb[0].mxu0
        %1184 = vmatprep.mubr.f32.mxu0 %v1020
        %1185 = vmatmul.mubr.f32.gmra.mrb[0].mxu0 %v972
        %v1186 = vpop.f32.mrb[0].mxu0
        %v1187 = vadd.f32 0.0, %v1186
        %v1188 = vpop.f32.mrb[0].mxu0
        %1189 = vmatprep.mubr.f32.mxu0 %v1021
        %1190 = vmatmul.mubr.f32.gmra.mrb[0].mxu0 %v973
        %v1191 = vpop.f32.mrb[0].mxu0
        %v1192 = vadd.f32 0.0, %v1191
        %v1193 = vpop.f32.mrb[0].mxu0
        %1194 = vmatprep.mubr.f32.mxu0 %v1022
        %1195 = vmatmul.mubr.f32.gmra.mrb[0].mxu0 %v974
        %v1196 = vpop.f32.mrb[0].mxu0
        %v1197 = vadd.f32 0.0, %v1196
        %v1198 = vpop.f32.mrb[0].mxu0
        %1199 = vmatprep.mubr.f32.mxu0 %v1023
        %1200 = vmatmul.mubr.f32.gmra.mrb[0].mxu0 %v975
        %v1201 = vpop.f32.mrb[0].mxu0
        %v1202 = vadd.f32 0.0, %v1201
        %v1203 = vpop.f32.mrb[0].mxu0
        %1204 = vmatprep.mubr.f32.mxu0 %v1024
        %1205 = vmatmul.mubr.f32.gmra.mrb[0].mxu0 %v976
        %v1206 = vpop.f32.mrb[0].mxu0
        %v1207 = vadd.f32 0.0, %v1206
        %v1208 = vpop.f32.mrb[0].mxu0
        %1209 = vmatprep.mubr.f32.mxu0 %v1025
        %1210 = vmatmul.mubr.f32.gmra.mrb[0].mxu0 %v977
        %v1211 = vpop.f32.mrb[0].mxu0
        %v1212 = vadd.f32 0.0, %v1211
        %v1213 = vpop.f32.mrb[0].mxu0
        %1214 = vmatprep.mubr.f32.mxu0 %v1026
        %1215 = vmatmul.mubr.f32.gmra.mrb[0].mxu0 %v978
        %v1216 = vpop.f32.mrb[0].mxu0
        %v1217 = vadd.f32 0.0, %v1216
        %v1218 = vpop.f32.mrb[0].mxu0
        %1219 = vmatprep.mubr.f32.mxu0 %v1027
        %1220 = vmatmul.mubr.f32.gmra.mrb[0].mxu0 %v979
        %v1221 = vpop.f32.mrb[0].mxu0
        %v1222 = vadd.f32 0.0, %v1221
        %v1223 = vpop.f32.mrb[0].mxu0
        %1224 = vmatprep.mubr.f32.mxu0 %v1028
        %1225 = vmatmul.mubr.f32.gmra.mrb[0].mxu0 %v980
        %v1226 = vpop.f32.mrb[0].mxu0
        %v1227 = vadd.f32 0.0, %v1226
        %v1228 = vpop.f32.mrb[0].mxu0
        %1229 = vmatprep.mubr.f32.mxu0 %v1029
        %1230 = vmatmul.mubr.f32.gmra.mrb[0].mxu0 %v981
        %v1231 = vpop.f32.mrb[0].mxu0
        %v1232 = vadd.f32 0.0, %v1231
        %v1233 = vpop.f32.mrb[0].mxu0
        %1234 = vmatprep.mubr.f32.mxu0 %v1030
        %1235 = vmatmul.mubr.f32.gmra.mrb[0].mxu0 %v982
        %v1236 = vpop.f32.mrb[0].mxu0
        %v1237 = vadd.f32 0.0, %v1236
        %v1238 = vpop.f32.mrb[0].mxu0
        %1239 = vmatprep.mubr.f32.mxu0 %v1031
        %1240 = vmatmul.mubr.f32.gmra.mrb[0].mxu0 %v983
        %v1241 = vpop.f32.mrb[0].mxu0
        %v1242 = vadd.f32 0.0, %v1241
        %v1243 = vpop.f32.mrb[0].mxu0
        %1244 = vdwg.mxu0
        %1245 = vmatprep.subr.mxu0 0.0
        %1246 = vmatpush1.msra.mxu0 %v1064
        %1247 = vmatprep.subr.mxu0 0.0
        %1248 = vmatpush1.msra.mxu0 %v1065
        %1249 = vmatprep.subr.mxu0 0.0
        %1250 = vmatpush1.msra.mxu0 %v1066
        %1251 = vmatprep.subr.mxu0 0.0
        %1252 = vmatpush1.msra.mxu0 %v1067
        %1253 = vmatprep.subr.mxu0 0.0
        %1254 = vmatpush1.msra.mxu0 0.0
        %1255 = vmatprep.subr.mxu0 0.0
        %1256 = vmatpush1.msra.mxu0 0.0
        %1257 = vmatprep.subr.mxu0 0.0
        %1258 = vmatpush1.msra.mxu0 0.0
        %1259 = vmatprep.subr.mxu0 0.0
        %1260 = vmatpush1.msra.mxu0 0.0
        %1261 = vmatprep.subr.mxu0 0.0
        %1262 = vmatpush1.msra.mxu0 0.0
        %1263 = vmatprep.subr.mxu0 0.0
        %1264 = vmatpush1.msra.mxu0 0.0
        %1265 = vmatprep.subr.mxu0 0.0
        %1266 = vmatpush1.msra.mxu0 0.0
        %1267 = vmatprep.subr.mxu0 0.0
        %1268 = vmatpush1.msra.mxu0 0.0
        %1269 = vmatprep.subr.mxu0 0.0
        %1270 = vmatpush1.msra.mxu0 0.0
        %1271 = vmatprep.subr.mxu0 0.0
        %1272 = vmatpush1.msra.mxu0 0.0
        %1273 = vmatprep.subr.mxu0 0.0
        %1274 = vmatpush1.msra.mxu0 0.0
        %1275 = vmatprep.subr.mxu0 0.0
        %1276 = vmatpush1.msra.mxu0 0.0
        %1277 = vmatprep.subr.mxu0 0.0
        %1278 = vmatpush1.msra.mxu0 0.0
        %1279 = vmatprep.subr.mxu0 0.0
        %1280 = vmatpush1.msra.mxu0 0.0
        %1281 = vmatprep.subr.mxu0 0.0
        %1282 = vmatpush1.msra.mxu0 0.0
        %1283 = vmatprep.subr.mxu0 0.0
        %1284 = vmatpush1.msra.mxu0 0.0
        %1285 = vmatprep.subr.mxu0 0.0
        %1286 = vmatpush1.msra.mxu0 0.0
        %1287 = vmatprep.subr.mxu0 0.0
        %1288 = vmatpush1.msra.mxu0 0.0
        %1289 = vmatprep.subr.mxu0 0.0
        %1290 = vmatpush1.msra.mxu0 0.0
        %1291 = vmatprep.subr.mxu0 0.0
        %1292 = vmatpush1.msra.mxu0 0.0
        %1293 = vmatprep.subr.mxu0 0.0
        %1294 = vmatpush1.msra.mxu0 0.0
        %1295 = vmatprep.subr.mxu0 0.0
        %1296 = vmatpush1.msra.mxu0 0.0
        %1297 = vmatprep.subr.mxu0 0.0
        %1298 = vmatpush1.msra.mxu0 0.0
        %1299 = vmatprep.subr.mxu0 0.0
        %1300 = vmatpush1.msra.mxu0 0.0
        %1301 = vmatprep.subr.mxu0 0.0
        %1302 = vmatpush1.msra.mxu0 0.0
        %1303 = vmatprep.subr.mxu0 0.0
        %1304 = vmatpush1.msra.mxu0 0.0
        %1305 = vmatprep.subr.mxu0 0.0
        %1306 = vmatpush1.msra.mxu0 0.0
        %1307 = vmatprep.subr.mxu0 0.0
        %1308 = vmatpush1.msra.mxu0 0.0
        %1309 = vmatprep.mubr.f32.mxu0 0.0
        %1310 = vmatmul.mubr.f32.gmra.mrb[0].mxu0 %v1068
        %v1311 = vpop.f32.mrb[0].mxu0
        %v1312 = vadd.f32 %v1167, %v1311
        %v1313 = vpop.f32.mrb[0].mxu0
        %1314 = vmatprep.mubr.f32.mxu0 0.0
        %1315 = vmatmul.mubr.f32.gmra.mrb[0].mxu0 %v1070
        %v1316 = vpop.f32.mrb[0].mxu0
        %v1317 = vadd.f32 %v1172, %v1316
        %v1318 = vpop.f32.mrb[0].mxu0
        %1319 = vmatprep.mubr.f32.mxu0 0.0
        %1320 = vmatmul.mubr.f32.gmra.mrb[0].mxu0 %v1072
        %v1321 = vpop.f32.mrb[0].mxu0
        %v1322 = vadd.f32 %v1177, %v1321
        %v1323 = vpop.f32.mrb[0].mxu0
        %1324 = vmatprep.mubr.f32.mxu0 0.0
        %1325 = vmatmul.mubr.f32.gmra.mrb[0].mxu0 %v1074
        %v1326 = vpop.f32.mrb[0].mxu0
        %v1327 = vadd.f32 %v1182, %v1326
        %v1328 = vpop.f32.mrb[0].mxu0
        %1329 = vmatprep.mubr.f32.mxu0 0.0
        %1330 = vmatmul.mubr.f32.gmra.mrb[0].mxu0 %v1076
        %v1331 = vpop.f32.mrb[0].mxu0
        %v1332 = vadd.f32 %v1187, %v1331
        %v1333 = vpop.f32.mrb[0].mxu0
        %1334 = vmatprep.mubr.f32.mxu0 0.0
        %1335 = vmatmul.mubr.f32.gmra.mrb[0].mxu0 %v1078
        %v1336 = vpop.f32.mrb[0].mxu0
        %v1337 = vadd.f32 %v1192, %v1336
        %v1338 = vpop.f32.mrb[0].mxu0
        %1339 = vmatprep.mubr.f32.mxu0 0.0
        %1340 = vmatmul.mubr.f32.gmra.mrb[0].mxu0 %v1080
        %v1341 = vpop.f32.mrb[0].mxu0
        %v1342 = vadd.f32 %v1197, %v1341
        %v1343 = vpop.f32.mrb[0].mxu0
        %1344 = vmatprep.mubr.f32.mxu0 0.0
        %1345 = vmatmul.mubr.f32.gmra.mrb[0].mxu0 %v1082
        %v1346 = vpop.f32.mrb[0].mxu0
        %v1347 = vadd.f32 %v1202, %v1346
        %v1348 = vpop.f32.mrb[0].mxu0
        %1349 = vmatprep.mubr.f32.mxu0 0.0
        %1350 = vmatmul.mubr.f32.gmra.mrb[0].mxu0 %v1084
        %v1351 = vpop.f32.mrb[0].mxu0
        %v1352 = vadd.f32 %v1207, %v1351
        %v1353 = vpop.f32.mrb[0].mxu0
        %1354 = vmatprep.mubr.f32.mxu0 0.0
        %1355 = vmatmul.mubr.f32.gmra.mrb[0].mxu0 %v1086
        %v1356 = vpop.f32.mrb[0].mxu0
        %v1357 = vadd.f32 %v1212, %v1356
        %v1358 = vpop.f32.mrb[0].mxu0
        %1359 = vmatprep.mubr.f32.mxu0 0.0
        %1360 = vmatmul.mubr.f32.gmra.mrb[0].mxu0 %v1088
        %v1361 = vpop.f32.mrb[0].mxu0
        %v1362 = vadd.f32 %v1217, %v1361
        %v1363 = vpop.f32.mrb[0].mxu0
        %1364 = vmatprep.mubr.f32.mxu0 0.0
        %1365 = vmatmul.mubr.f32.gmra.mrb[0].mxu0 %v1090
        %v1366 = vpop.f32.mrb[0].mxu0
        %v1367 = vadd.f32 %v1222, %v1366
        %v1368 = vpop.f32.mrb[0].mxu0
        %1369 = vmatprep.mubr.f32.mxu0 0.0
        %1370 = vmatmul.mubr.f32.gmra.mrb[0].mxu0 %v1092
        %v1371 = vpop.f32.mrb[0].mxu0
        %v1372 = vadd.f32 %v1227, %v1371
        %v1373 = vpop.f32.mrb[0].mxu0
        %1374 = vmatprep.mubr.f32.mxu0 0.0
        %1375 = vmatmul.mubr.f32.gmra.mrb[0].mxu0 %v1094
        %v1376 = vpop.f32.mrb[0].mxu0
        %v1377 = vadd.f32 %v1232, %v1376
        %v1378 = vpop.f32.mrb[0].mxu0
        %1379 = vmatprep.mubr.f32.mxu0 0.0
        %1380 = vmatmul.mubr.f32.gmra.mrb[0].mxu0 %v1096
        %v1381 = vpop.f32.mrb[0].mxu0
        %v1382 = vadd.f32 %v1237, %v1381
        %v1383 = vpop.f32.mrb[0].mxu0
        %1384 = vmatprep.mubr.f32.mxu0 0.0
        %1385 = vmatmul.mubr.f32.gmra.mrb[0].mxu0 %v1098
        %v1386 = vpop.f32.mrb[0].mxu0
        %v1387 = vadd.f32 %v1242, %v1386
        %v1388 = vpop.f32.mrb[0].mxu0
        %1389 = vdwg.mxu0
        %s1390 = smul.u32 %s234, 16
        %s1391 = scalar_lea.vmem %s225, %s1390
        %1392 = vst [vmem:[%s1391] sm:$0xff] %v1312
        %1393 = vst [vmem:[%s1391 + $0x8] sm:$0xff] %v1317
        %1394 = vst [vmem:[%s1391 + $0x10] sm:$0xff] %v1322
        %1395 = vst [vmem:[%s1391 + $0x18] sm:$0xff] %v1327
        %1396 = vst [vmem:[%s1391 + $0x20] sm:$0xff] %v1332
        %1397 = vst [vmem:[%s1391 + $0x28] sm:$0xff] %v1337
        %1398 = vst [vmem:[%s1391 + $0x30] sm:$0xff] %v1342
        %1399 = vst [vmem:[%s1391 + $0x38] sm:$0xff] %v1347
        %1400 = vst [vmem:[%s1391 + $0x40] sm:$0xff] %v1352
        %1401 = vst [vmem:[%s1391 + $0x48] sm:$0xff] %v1357
        %1402 = vst [vmem:[%s1391 + $0x50] sm:$0xff] %v1362
        %1403 = vst [vmem:[%s1391 + $0x58] sm:$0xff] %v1367
        %1404 = vst [vmem:[%s1391 + $0x60] sm:$0xff] %v1372
        %1405 = vst [vmem:[%s1391 + $0x68] sm:$0xff] %v1377
        %1406 = vst [vmem:[%s1391 + $0x70] sm:$0xff] %v1382
        %1407 = vst [vmem:[%s1391 + $0x78] sm:$0xff] %v1387
        %v1408 = vadd.f32 %v1312, %v1317
        %v1409 = vadd.f32 %v1408, %v1322
        %v1410 = vadd.f32 %v1409, %v1327
        %v1411 = vadd.f32 %v1410, %v1332
        %v1412 = vadd.f32 %v1411, %v1337
        %v1413 = vadd.f32 %v1412, %v1342
        %v1414 = vadd.f32 %v1413, %v1347
        %v1415 = vadd.f32 %v1414, %v1352
        %v1416 = vadd.f32 %v1415, %v1357
        %v1417 = vadd.f32 %v1416, %v1362
        %v1418 = vadd.f32 %v1417, %v1367
        %v1419 = vadd.f32 %v1418, %v1372
        %v1420 = vadd.f32 %v1419, %v1377
        %v1421 = vadd.f32 %v1420, %v1382
        %v1422 = vadd.f32 %v1421, %v1387
        %v1423 = vrot.slane %v1422, 4
        %v1424 = vadd.f32 %v1422, %v1423
        %v1425 = vrot.slane %v1424, 2
        %v1426 = vadd.f32 %v1424, %v1425
        %v1427 = vrot.slane %v1426, 1
        %v1428 = vadd.f32 %v1426, %v1427
        %v1429 = vmul.f32 %v1428, 0.0078125
        %v1430 = vsub.f32 %v1312, %v1429
        %v1431 = vsub.f32 %v1317, %v1429
        %v1432 = vsub.f32 %v1322, %v1429
        %v1433 = vsub.f32 %v1327, %v1429
        %v1434 = vsub.f32 %v1332, %v1429
        %v1435 = vsub.f32 %v1337, %v1429
        %v1436 = vsub.f32 %v1342, %v1429
        %v1437 = vsub.f32 %v1347, %v1429
        %v1438 = vsub.f32 %v1352, %v1429
        %v1439 = vsub.f32 %v1357, %v1429
        %v1440 = vsub.f32 %v1362, %v1429
        %v1441 = vsub.f32 %v1367, %v1429
        %v1442 = vsub.f32 %v1372, %v1429
        %v1443 = vsub.f32 %v1377, %v1429
        %v1444 = vsub.f32 %v1382, %v1429
        %v1445 = vsub.f32 %v1387, %v1429
        %v1446 = vmul.f32 %v1430, %v1430
        %v1447 = vmul.f32 %v1431, %v1431
        %v1448 = vmul.f32 %v1432, %v1432
        %v1449 = vmul.f32 %v1433, %v1433
        %v1450 = vmul.f32 %v1434, %v1434
        %v1451 = vmul.f32 %v1435, %v1435
        %v1452 = vmul.f32 %v1436, %v1436
        %v1453 = vmul.f32 %v1437, %v1437
        %v1454 = vmul.f32 %v1438, %v1438
        %v1455 = vmul.f32 %v1439, %v1439
        %v1456 = vmul.f32 %v1440, %v1440
        %v1457 = vmul.f32 %v1441, %v1441
        %v1458 = vmul.f32 %v1442, %v1442
        %v1459 = vmul.f32 %v1443, %v1443
        %v1460 = vmul.f32 %v1444, %v1444
        %v1461 = vmul.f32 %v1445, %v1445
        %v1462 = vadd.f32 %v1446, %v1447
        %v1463 = vadd.f32 %v1462, %v1448
        %v1464 = vadd.f32 %v1463, %v1449
        %v1465 = vadd.f32 %v1464, %v1450
        %v1466 = vadd.f32 %v1465, %v1451
        %v1467 = vadd.f32 %v1466, %v1452
        %v1468 = vadd.f32 %v1467, %v1453
        %v1469 = vadd.f32 %v1468, %v1454
        %v1470 = vadd.f32 %v1469, %v1455
        %v1471 = vadd.f32 %v1470, %v1456
        %v1472 = vadd.f32 %v1471, %v1457
        %v1473 = vadd.f32 %v1472, %v1458
        %v1474 = vadd.f32 %v1473, %v1459
        %v1475 = vadd.f32 %v1474, %v1460
        %v1476 = vadd.f32 %v1475, %v1461
        %v1477 = vrot.slane %v1476, 4
        %v1478 = vadd.f32 %v1476, %v1477
        %v1479 = vrot.slane %v1478, 2
        %v1480 = vadd.f32 %v1478, %v1479
        %v1481 = vrot.slane %v1480, 1
        %v1482 = vadd.f32 %v1480, %v1481
        %s1483 = smul.u32 %s229, 128
        %s1484 = scvt.s32.f32 %s1483
        %s1485 = sadd.f32 %s1484, 128.0
        %v1486 = vstv %s1485
        %v1487 = vrcp.pop %v1486
        %s1488 = vtos %v1487
        %s1489 = smul.f32 128.0, %s1488
        %v1490 = vld [vmem:[#allocation2] sm:$0x1]
        %v1491 = vsub.f32 %v1429, %v1490
        %v1492 = vstv %s1489
        %v1493 = vmul.f32 %v1491, %v1492
        %v1494 = vadd.f32 %v1490, %v1493
        %1495 = vst [vmem:[#allocation2] sm:$0x1] %v1494
        %v1496 = vld [vmem:[#allocation3] sm:$0x1]
        %v1497 = vadd.f32 %v1496, %v1482
        %v1498 = vmul.f32 %v1491, %v1491
        %s1499 = smul.f32 %s1484, %s1489
        %v1500 = vstv %s1499
        %v1501 = vmul.f32 %v1498, %v1500
        %v1502 = vadd.f32 %v1497, %v1501
        %1503 = vst [vmem:[#allocation3] sm:$0x1] %v1502
      $region41: #{upsample_block_forward.1} parent=35 // loop_footer
        %s233 = sadd.s32 1, %s229
      $region42: #{upsample_block_forward.1} parent=35 // loop_footer_branch
        %228 = sbr.rel target = $region38
      $region43: #{upsample_block_forward.1} parent=35 // loop_exit
        _
      %v1504 = vld [vmem:[#allocation2] sm:$0x1]
      %v1505 = vld [vmem:[#allocation3] sm:$0x1]
      %1507 = vrot.lane.b32.xlu0 %v1504, 96
      %v1508 = vpop.permute.xlu0 %1507
      %v1510 = vadd.f32 %v1504, %v1508
      %1511 = vrot.lane.b32.xlu0 %v1504, 64
      %v1512 = vpop.permute.xlu0 %1511
      %v1514 = vadd.f32 %v1510, %v1512
      %1515 = vrot.lane.b32.xlu0 %v1504, 32
      %v1516 = vpop.permute.xlu0 %1515
      %v1518 = vadd.f32 %v1514, %v1516
      %v1519 = vmul.f32 %v1518, 0.25
      %v1521 = vlaneseq
      %v1522 = vshrl.u32 %v1521, 7
      %v1523 = vsub.s32 0, %v1522
      %v1524 = vrot.slane %v1519, %v1523
      %1525 = vrot.lane.b32.xlu0 %v1524, 32
      %v1526 = vpop.permute.xlu0 %1525
      %1528 = vrot.lane.b32.xlu0 %v1524, 64
      %v1529 = vpop.permute.xlu0 %1528
      %1531 = vrot.lane.b32.xlu0 %v1524, 96
      %v1532 = vpop.permute.xlu0 %1531
      %vm1534 = vcmask 261120
      %v1535 = vsel %vm1534, %v1519, %v1526
      %vm1536 = vcmask 523264
      %v1537 = vsel %vm1536, %v1535, %v1529
      %vm1538 = vcmask 785408
      %v1539 = vsel %vm1538, %v1537, %v1532
      %v1540 = vsub.f32 %v1504, %v1539
      %v1541 = vmul.f32 %v1540, %v1540
      %v1542 = vmul.f32 %v1541, 256.0
      %v1543 = vadd.f32 %v1505, %v1542
      %1545 = vrot.lane.b32.xlu0 %v1543, 96
      %v1546 = vpop.permute.xlu0 %1545
      %v1548 = vadd.f32 %v1543, %v1546
      %1549 = vrot.lane.b32.xlu0 %v1543, 64
      %v1550 = vpop.permute.xlu0 %1549
      %v1552 = vadd.f32 %v1548, %v1550
      %1553 = vrot.lane.b32.xlu0 %v1543, 32
      %v1554 = vpop.permute.xlu0 %1553
      %v1556 = vadd.f32 %v1552, %v1554
      %v1557 = vmul.f32 %v1556, 0.0009765625
      %v1558 = vadd.f32 %v1557, 1e-05
      %v1559 = vrsqrt.pop %v1558
      %v1560 = vld [vmem:[%s217] sm:$0x1]
      %v1562 = vlaneseq
      %v1563 = vshrl.u32 %v1562, 7
      %v1564 = vsub.s32 0, %v1563
      %v1565 = vrot.slane %v1559, %v1564
      %1566 = vrot.lane.b32.xlu0 %v1565, 32
      %v1567 = vpop.permute.xlu0 %1566
      %1569 = vrot.lane.b32.xlu0 %v1565, 64
      %v1570 = vpop.permute.xlu0 %1569
      %1572 = vrot.lane.b32.xlu0 %v1565, 96
      %v1573 = vpop.permute.xlu0 %1572
      %v1575 = vsel %vm1534, %v1559, %v1567
      %v1576 = vsel %vm1536, %v1575, %v1570
      %v1577 = vsel %vm1538, %v1576, %v1573
      %v1578 = vmul.f32 %v1560, %v1577
      %v1579 = vld [vmem:[%s220] sm:$0x1]
      %v1580 = vmul.f32 %v1539, %v1578
      %v1581 = vsub.f32 %v1579, %v1580
      loop: start=0, step=1, limit=2
      $region44: #{upsample_block_forward.1} parent=35 // loop_pre_header
        _
      $region45: #{upsample_block_forward.1} parent=35 // loop_header
        %s1583 = sphi 0, %s1587
        %p1584 = scmp.ge.s32.totalorder %s1583, 2
      $region46: #{upsample_block_forward.1} parent=35 // loop_header_branch
        %1586 = sbr.rel (%p1584) target = $region50
      $region47: #{upsample_block_forward.1} parent=35 // loop_body
        %s1588 = smul.u32 %s1583, 8
        %s1589 = smul.u32 %s1588, 16
        %s1590 = scalar_lea.vmem %s225, %s1589
        %v1591 = vld [vmem:[%s1590] sm:$0xff]
        %v1592 = vld [vmem:[%s1590 + $0x8] sm:$0xff]
        %v1593 = vld [vmem:[%s1590 + $0x10] sm:$0xff]
        %v1594 = vld [vmem:[%s1590 + $0x18] sm:$0xff]
        %v1595 = vld [vmem:[%s1590 + $0x20] sm:$0xff]
        %v1596 = vld [vmem:[%s1590 + $0x28] sm:$0xff]
        %v1597 = vld [vmem:[%s1590 + $0x30] sm:$0xff]
        %v1598 = vld [vmem:[%s1590 + $0x38] sm:$0xff]
        %v1599 = vld [vmem:[%s1590 + $0x40] sm:$0xff]
        %v1600 = vld [vmem:[%s1590 + $0x48] sm:$0xff]
        %v1601 = vld [vmem:[%s1590 + $0x50] sm:$0xff]
        %v1602 = vld [vmem:[%s1590 + $0x58] sm:$0xff]
        %v1603 = vld [vmem:[%s1590 + $0x60] sm:$0xff]
        %v1604 = vld [vmem:[%s1590 + $0x68] sm:$0xff]
        %v1605 = vld [vmem:[%s1590 + $0x70] sm:$0xff]
        %v1606 = vld [vmem:[%s1590 + $0x78] sm:$0xff]
        %v1608 = vlaneseq
        %v1609 = vshrl.u32 %v1608, 7
        %v1610 = vsub.s32 0, %v1609
        %v1611 = vrot.slane %v1578, %v1610
        %v1613 = vmul.f32 %v1591, %v1611
        %v1614 = vmul.f32 %v1592, %v1611
        %v1615 = vmul.f32 %v1593, %v1611
        %v1616 = vmul.f32 %v1594, %v1611
        %v1617 = vmul.f32 %v1595, %v1611
        %v1618 = vmul.f32 %v1596, %v1611
        %v1619 = vmul.f32 %v1597, %v1611
        %v1620 = vmul.f32 %v1598, %v1611
        %v1621 = vmul.f32 %v1599, %v1611
        %v1622 = vmul.f32 %v1600, %v1611
        %v1623 = vmul.f32 %v1601, %v1611
        %v1624 = vmul.f32 %v1602, %v1611
        %v1625 = vmul.f32 %v1603, %v1611
        %v1626 = vmul.f32 %v1604, %v1611
        %v1627 = vmul.f32 %v1605, %v1611
        %v1628 = vmul.f32 %v1606, %v1611
        %v1630 = vlaneseq
        %v1631 = vshrl.u32 %v1630, 7
        %v1632 = vsub.s32 0, %v1631
        %v1633 = vrot.slane %v1581, %v1632
        %v1635 = vadd.f32 %v1613, %v1633
        %v1636 = vadd.f32 %v1614, %v1633
        %v1637 = vadd.f32 %v1615, %v1633
        %v1638 = vadd.f32 %v1616, %v1633
        %v1639 = vadd.f32 %v1617, %v1633
        %v1640 = vadd.f32 %v1618, %v1633
        %v1641 = vadd.f32 %v1619, %v1633
        %v1642 = vadd.f32 %v1620, %v1633
        %v1643 = vadd.f32 %v1621, %v1633
        %v1644 = vadd.f32 %v1622, %v1633
        %v1645 = vadd.f32 %v1623, %v1633
        %v1646 = vadd.f32 %v1624, %v1633
        %v1647 = vadd.f32 %v1625, %v1633
        %v1648 = vadd.f32 %v1626, %v1633
        %v1649 = vadd.f32 %v1627, %v1633
        %v1650 = vadd.f32 %v1628, %v1633
        %v1651 = vmax.f32 %v1635, 0.0
        %v1652 = vmax.f32 %v1636, 0.0
        %v1653 = vmax.f32 %v1637, 0.0
        %v1654 = vmax.f32 %v1638, 0.0
        %v1655 = vmax.f32 %v1639, 0.0
        %v1656 = vmax.f32 %v1640, 0.0
        %v1657 = vmax.f32 %v1641, 0.0
        %v1658 = vmax.f32 %v1642, 0.0
        %v1659 = vmax.f32 %v1643, 0.0
        %v1660 = vmax.f32 %v1644, 0.0
        %v1661 = vmax.f32 %v1645, 0.0
        %v1662 = vmax.f32 %v1646, 0.0
        %v1663 = vmax.f32 %v1647, 0.0
        %v1664 = vmax.f32 %v1648, 0.0
        %v1665 = vmax.f32 %v1649, 0.0
        %v1666 = vmax.f32 %v1650, 0.0
        %1667 = vst [vmem:[%s1590] sm:$0xff] %v1651
        %1668 = vst [vmem:[%s1590 + $0x8] sm:$0xff] %v1652
        %1669 = vst [vmem:[%s1590 + $0x10] sm:$0xff] %v1653
        %1670 = vst [vmem:[%s1590 + $0x18] sm:$0xff] %v1654
        %1671 = vst [vmem:[%s1590 + $0x20] sm:$0xff] %v1655
        %1672 = vst [vmem:[%s1590 + $0x28] sm:$0xff] %v1656
        %1673 = vst [vmem:[%s1590 + $0x30] sm:$0xff] %v1657
        %1674 = vst [vmem:[%s1590 + $0x38] sm:$0xff] %v1658
        %1675 = vst [vmem:[%s1590 + $0x40] sm:$0xff] %v1659
        %1676 = vst [vmem:[%s1590 + $0x48] sm:$0xff] %v1660
        %1677 = vst [vmem:[%s1590 + $0x50] sm:$0xff] %v1661
        %1678 = vst [vmem:[%s1590 + $0x58] sm:$0xff] %v1662
        %1679 = vst [vmem:[%s1590 + $0x60] sm:$0xff] %v1663
        %1680 = vst [vmem:[%s1590 + $0x68] sm:$0xff] %v1664
        %1681 = vst [vmem:[%s1590 + $0x70] sm:$0xff] %v1665
        %1682 = vst [vmem:[%s1590 + $0x78] sm:$0xff] %v1666
      $region48: #{upsample_block_forward.1} parent=35 // loop_footer
        %s1587 = sadd.s32 1, %s1583
      $region49: #{upsample_block_forward.1} parent=35 // loop_footer_branch
        %1582 = sbr.rel target = $region45
      $region50: #{upsample_block_forward.1} parent=35 // loop_exit
        _
      %p1683 = scmp.lt.s32.totalorder %s15, 1
      %s1684 = scalar_select %p1683, %s15, 1
      %s1685 = smul.addr %s1684, 32
      %s1686 = smul.addr %s1685, 8
      %s1687 = scalar_lea.vmem %s4, %s1686
      // Predicated region
      $region51: #{upsample_block_forward.1} parent=35 // pred_check
        %p1688 = pneg %p132
      $region52: #{upsample_block_forward.1} parent=35 // pred_check_branch
        %1690 = sbr.rel (%p1688) target = $region54
      $region53: #{upsample_block_forward.1} parent=35 // pred_region
        _
      $region54: #{upsample_block_forward.1} parent=35 // pred_fallthru
        _
    $region36: #{upsample_block_forward.1} parent=5 // pred_fallthru
      _
    %p1691 = scmp.le.s32.totalorder 2, %s10
    // Predicated region
    $region55: #{upsample_block_forward.1} parent=5 // pred_check
      %p1692 = pneg %p1691
    $region56: #{upsample_block_forward.1} parent=5 // pred_check_branch
      %1694 = sbr.rel (%p1692) target = $region58
    $region57: #{upsample_block_forward.1} parent=5 // pred_region
      %s1695 = ssub.s32 %s10, 2
      // Predicated region
      $region59: #{upsample_block_forward.1} parent=57 // pred_check
        %p1696 = pneg %p138
      $region60: #{upsample_block_forward.1} parent=57 // pred_check_branch
        %1698 = sbr.rel (%p1696) target = $region62
      $region61: #{upsample_block_forward.1} parent=57 // pred_region
        %p1699 = scmp.lt.s32.totalorder %s16, 1
        %s1700 = scalar_select %p1699, %s16, 1
        %s1701 = smul.addr %s1700, 32
        %s1702 = smul.addr %s1701, 8
        %s1703 = scalar_lea.vmem %s4, %s1702
      $region62: #{upsample_block_forward.1} parent=57 // pred_fallthru
        _
    $region58: #{upsample_block_forward.1} parent=5 // pred_fallthru
      _
  $region6: #{upsample_block_forward.1} parent=0 // loop_footer
    %s14 = sadd.s32 1, %s10
  $region7: #{upsample_block_forward.1} parent=0 // loop_footer_branch
    %9 = sbr.rel target = $region3
  $region8: #{upsample_block_forward.1} parent=0 // loop_exit
    _

</llo_original>
